<compile_context>
chip_gen: v5e
topology: v5e:2x2
jax: 0.10.0
libtpu: 0.0.40
codegen_flags: <defaults>
</compile_context>

<pallas_src>
import jax
import jax.numpy as jnp
from jax.experimental import pallas as pl
from jax.experimental.pallas import tpu as pltpu

BN_EPS = 1e-5
LEAKY_SLOPE = 0.1
MATMUL_DTYPE = jnp.bfloat16        # MXU operand dtype (accumulation is f32)


def _pick_vmem_limit_bytes():
    """Per-generation scoped-VMEM limit (96 MiB on 128-MiB parts, 48 MiB on v7x)."""
    default = 32 * 1024 * 1024
    try:
        info = pltpu.get_tpu_info()
        cap = getattr(info, "vmem_capacity_bytes", None)
        if cap is None:
            return default
        if cap >= 128 * 1024 * 1024:
            return 96 * 1024 * 1024        # v5e / v6e
        return 48 * 1024 * 1024            # v7x (64 MiB per TensorCore)
    except Exception:
        return default


def _full_spec(shape):
    """BlockSpec for a small, grid-invariant (fully resident) operand."""
    nd = len(shape)
    return pl.BlockSpec(shape, lambda n: (0,) * nd)


# ---------------------------------------------------------------------------
# Kernel 1: conv1 (3x3, s=1, p=1) on tap-folded input + BN1 partial statistics
# ---------------------------------------------------------------------------
def _conv1_stats_kernel(xf_ref, w1_ref, z1_ref, s_ref, m2_ref):
    # xf_ref : (1, H + T-1, W, K) bf16 tap-folded input.
    #          T==1: K = 9*Cin (all 9 taps folded wrapper-side, single matmul)
    #          T==3: K = 3*Cin (column taps folded; 3 in-kernel row-tap matmuls)
    # w1_ref : (T, K, Chid) bf16 conv1 weight, matching fold
    # z1_ref : (1, H, W, Chid) bf16 raw conv1 output (bias dropped: a per-
    #          channel constant cancels in training-mode BN)
    # s_ref  : (1, 1, Chid) f32 per-tile channel sum
    # m2_ref : (1, 1, Chid) f32 per-tile sum of squared deviations
    _, Hrows, W, K = xf_ref.shape
    T, _, Chid = w1_ref.shape
    H = Hrows - (T - 1)
    M = H * W

    xfull = xf_ref[0]                                    # (H+T-1, W, K)
    acc = jnp.zeros((M, Chid), jnp.float32)
    # Only leading-dim (row) slices remain: no lane/sublane-crossing copies.
    for t in range(T):
        patch = xfull[t:t + H].reshape(M, K)
        acc = acc + jnp.dot(patch, w1_ref[t],
                            preferred_element_type=jnp.float32)

    z1_ref[...] = acc.reshape(1, H, W, Chid).astype(z1_ref.dtype)

    s = jnp.sum(acc, axis=0, keepdims=True)              # (1, Chid)
    mu = s * (1.0 / M)
    m2 = jnp.sum((acc - mu) ** 2, axis=0, keepdims=True)
    s_ref[...] = s.reshape(1, 1, Chid)
    m2_ref[...] = m2.reshape(1, 1, Chid)


# ---------------------------------------------------------------------------
# Kernel 2: conv2 (4x4, s=2, p=1) as 4 matmuls with K = 4*Chid over the
#           space-to-depth packed, already-activated input + BN2 partial stats
# ---------------------------------------------------------------------------
def _conv2_stats_kernel(zp_ref, w2_ref, z2_ref, s_ref, m2_ref):
    # zp_ref : (1, Ho+1, Wo+1, 4*Chid) bf16 space-to-depth of the zero-padded
    #          BN1+LeakyReLU activation (BN/act applied wrapper-side, fused
    #          into the relayout pass; pad ring is exactly zero -> no mask).
    # w2_ref : (4, 4*Chid, Cout) bf16 conv2 weight, tap (A,B) -> one matrix
    # z2_ref : (1, Ho, Wo, Cout) bf16 raw conv2 output (bias dropped)
    # s_ref, m2_ref : (1, 1, Cout) f32 per-tile BN2 partial stats
    _, Hp, Wp, C4 = zp_ref.shape
    Ho, Wo = Hp - 1, Wp - 1
    Cout = w2_ref.shape[-1]
    M = Ho * Wo

    act = zp_ref[0]                                      # (Ho+1, Wo+1, 4*Chid) bf16
    # Pre-slice the two column-shift views ONCE (single sublane relayout each)
    # instead of per-tap; remaining per-tap slices are cheap leading-dim ones.
    cols = (act[:, 0:Wo, :], act[:, 1:Wo + 1, :])

    acc = jnp.zeros((M, Cout), jnp.float32)
    for a in range(2):
        for b in range(2):
            tap = cols[b][a:a + Ho].reshape(M, C4)
            acc = acc + jnp.dot(tap, w2_ref[2 * a + b],
                                preferred_element_type=jnp.float32)

    z2_ref[...] = acc.reshape(1, Ho, Wo, Cout).astype(z2_ref.dtype)

    s = jnp.sum(acc, axis=0, keepdims=True)
    mu = s * (1.0 / M)
    m2 = jnp.sum((acc - mu) ** 2, axis=0, keepdims=True)
    s_ref[...] = s.reshape(1, 1, Cout)
    m2_ref[...] = m2.reshape(1, 1, Cout)


# ---------------------------------------------------------------------------
# Kernel 3: apply BN2 + shortcut (AvgPool phases folded into K=4*Cin matmul,
#           spectral-normalized 1x1 weight) + residual add
# ---------------------------------------------------------------------------
def _bn2_shortcut_kernel(z2_ref, x4_ref, a2_ref, c2_ref, ws_ref, bs_ref, o_ref):
    # z2_ref : (1, Ho, Wo, Cout)  bf16 raw conv2 output
    # x4_ref : (1, Ho, Wo, 4*Cin) bf16 space-to-depth packed input (pool phases)
    # a2_ref, c2_ref : (1, Cout)  f32  BN2 scale / shift
    # ws_ref : (4*Cin, Cout)      bf16 spectral-normalized 1x1 weight,
    #                                  phase-tiled, with the AvgPool 0.25 baked in
    # bs_ref : (1, Cout)          f32  shortcut conv bias
    # o_ref  : (1, Ho, Wo, Cout)  f32
    _, Ho, Wo, Cout = o_ref.shape
    C4 = x4_ref.shape[-1]
    M = Ho * Wo

    sc = jnp.dot(x4_ref[0].reshape(M, C4), ws_ref[...],
                 preferred_element_type=jnp.float32) + bs_ref[...]
    z2 = z2_ref[0].astype(jnp.float32).reshape(M, Cout)
    out = z2 * a2_ref[...] + c2_ref[...] + sc
    o_ref[...] = out.reshape(1, Ho, Wo, Cout).astype(o_ref.dtype)


# ---------------------------------------------------------------------------
# Wrapper-side helpers (tiny per-channel math / pure-layout work only)
# ---------------------------------------------------------------------------
def _combine_bn_stats(sums, m2s, n_per_tile, gamma, beta):
    """Chan-style combine of per-tile (sum, M2) partials -> BN scale & shift."""
    s = sums[:, 0, :]                       # (T, C)
    m2 = m2s[:, 0, :]
    total = s.shape[0] * n_per_tile
    mean = jnp.sum(s, axis=0) / total
    tile_mean = s / n_per_tile
    m2_tot = jnp.sum(m2, axis=0) + n_per_tile * jnp.sum((tile_mean - mean) ** 2, axis=0)
    var = m2_tot / total                    # biased variance (training-mode BN)
    scale = gamma * jax.lax.rsqrt(var + BN_EPS)
    shift = beta - mean * scale
    return (scale.reshape(1, -1).astype(jnp.float32),
            shift.reshape(1, -1).astype(jnp.float32))


def _space_to_depth(x):
    """(N, H, W, C) -> (N, H//2, W//2, 4*C) with packed channel (2p+q)*C + c."""
    N, H, W, C = x.shape
    x = x.reshape(N, H // 2, 2, W // 2, 2, C)
    x = jnp.transpose(x, (0, 1, 3, 2, 4, 5))
    return x.reshape(N, H // 2, W // 2, 4 * C)


def _spectral_normalize(w2d, u, eps=1e-12):
    """One power iteration from the persisted u (torch spectral_norm semantics).
    NOTE: torch updates the persisted u in-place each training forward; the
    updated u is not returned here (single-forward output matches)."""
    v = w2d.T @ u
    v = v / (jnp.linalg.norm(v) + eps)
    u = w2d @ v
    u = u / (jnp.linalg.norm(u) + eps)
    sigma = u @ (w2d @ v)
    return w2d / sigma


def res_block_encoder_forward(x_nchw, params):
    """x_nchw: (N, Cin, H, W) f32.  Returns (N, Cout, H//2, W//2) f32."""
    N, Cin, H, W = x_nchw.shape
    assert H % 2 == 0 and W % 2 == 0, "spatial dims must be even"
    Chid = params["w1"].shape[0]
    Cout = params["w2"].shape[0]
    Ho, Wo = H // 2, W // 2

    cparams = pltpu.CompilerParams(
        dimension_semantics=("parallel",),
        vmem_limit_bytes=_pick_vmem_limit_bytes())

    x = jnp.transpose(x_nchw, (0, 2, 3, 1)).astype(jnp.float32)   # NCHW -> NHWC

    # ---------------- stage 1: conv1 + BN1 partial stats (tiled over batch) ---
    # Tap folding (fattens the MXU contraction; removes in-kernel lane-crossing
    # slices).  For small Cin fold all 9 taps (K=9*Cin, one matmul); otherwise
    # fold only the 3 column shifts (K=3*Cin, 3 row-tap matmuls).
    xpad = jnp.pad(x, ((0, 0), (1, 1), (1, 1), (0, 0)))
    w1_t = jnp.transpose(params["w1"], (2, 3, 1, 0))              # (3, 3, Cin, Chid)
    # NOTE: conv biases b1/b2 are dropped; a per-channel constant added before
    # training-mode BatchNorm is exactly cancelled by the mean subtraction.
    # (Not valid for eval-mode BN with running stats.)
    if Cin <= 16:
        taps = [xpad[:, dh:dh + H, dw:dw + W, :]
                for dh in range(3) for dw in range(3)]
        xfold = jnp.concatenate(taps, axis=-1).astype(MATMUL_DTYPE)   # (N, H, W, 9*Cin)
        w1fold = w1_t.reshape(1, 9 * Cin, Chid).astype(MATMUL_DTYPE)
    else:
        taps = [xpad[:, :, dw:dw + W, :] for dw in range(3)]
        xfold = jnp.concatenate(taps, axis=-1).astype(MATMUL_DTYPE)   # (N, H+2, W, 3*Cin)
        w1fold = w1_t.reshape(3, 3 * Cin, Chid).astype(MATMUL_DTYPE)

    z1, s1, m21 = pl.pallas_call(
        _conv1_stats_kernel,
        grid=(N,),
        in_specs=[pl.BlockSpec((1,) + xfold.shape[1:], lambda n: (n, 0, 0, 0)),
                  _full_spec(w1fold.shape)],
        out_specs=(pl.BlockSpec((1, H, W, Chid), lambda n: (n, 0, 0, 0)),
                   pl.BlockSpec((1, 1, Chid), lambda n: (n, 0, 0)),
                   pl.BlockSpec((1, 1, Chid), lambda n: (n, 0, 0))),
        out_shape=(jax.ShapeDtypeStruct((N, H, W, Chid), MATMUL_DTYPE),
                   jax.ShapeDtypeStruct((N, 1, Chid), jnp.float32),
                   jax.ShapeDtypeStruct((N, 1, Chid), jnp.float32)),
        compiler_params=cparams,
    )(xfold, w1fold)

    a1, c1 = _combine_bn_stats(s1, m21, H * W, params["gamma1"], params["beta1"])

    # BN1 affine + LeakyReLU fused (by XLA) into the existing pad + space-to-
    # depth relayout pass: the zero-pad ring stays exactly zero, so kernel 2
    # needs no iota mask and no full-size f32 upcast.
    y1 = z1.astype(jnp.float32) * a1.reshape(1, 1, 1, Chid) + c1.reshape(1, 1, 1, Chid)
    y1 = jnp.where(y1 > 0, y1, LEAKY_SLOPE * y1)
    z1p = _space_to_depth(
        jnp.pad(y1, ((0, 0), (1, 1), (1, 1), (0, 0)))).astype(MATMUL_DTYPE)
    # TODO(synk): fold this relayout into kernel 1's store / kernel 2's load to
    #             save one HBM round-trip of the largest intermediate.

    # conv2 weight regrouped: tap (A,B) -> (4*Chid, Cout), contraction over (p,q,c)
    w2 = jnp.transpose(params["w2"], (2, 3, 1, 0))       # (kh, kw, Chid, Cout)
    w2 = w2.reshape(2, 2, 2, 2, Chid, Cout)              # (A, p, B, q, c, o)
    w2 = jnp.transpose(w2, (0, 2, 1, 3, 4, 5)).reshape(4, 4 * Chid, Cout)
    w2 = w2.astype(MATMUL_DTYPE)

    z2, s2, m22 = pl.pallas_call(
        _conv2_stats_kernel,
        grid=(N,),
        in_specs=[pl.BlockSpec((1, Ho + 1, Wo + 1, 4 * Chid), lambda n: (n, 0, 0, 0)),
                  _full_spec((4, 4 * Chid, Cout))],
        out_specs=(pl.BlockSpec((1, Ho, Wo, Cout), lambda n: (n, 0, 0, 0)),
                   pl.BlockSpec((1, 1, Cout), lambda n: (n, 0, 0)),
                   pl.BlockSpec((1, 1, Cout), lambda n: (n, 0, 0))),
        out_shape=(jax.ShapeDtypeStruct((N, Ho, Wo, Cout), MATMUL_DTYPE),
                   jax.ShapeDtypeStruct((N, 1, Cout), jnp.float32),
                   jax.ShapeDtypeStruct((N, 1, Cout), jnp.float32)),
        compiler_params=cparams,
    )(z1p, w2)

    a2, c2 = _combine_bn_stats(s2, m22, Ho * Wo, params["gamma2"], params["beta2"])

    # shortcut weight: torch-style spectral_norm (1 power iteration, persisted u),
    # AvgPool's 0.25 and its 4 phases folded into a single (4*Cin, Cout) matmul.
    ws2d = params["ws"].reshape(Cout, Cin)
    wsn = _spectral_normalize(ws2d, params["u_s"])
    ws4 = (0.25 * jnp.tile(wsn.T, (4, 1))).astype(MATMUL_DTYPE)   # (4*Cin, Cout)
    bs = params["bs"].reshape(1, Cout).astype(jnp.float32)

    x4 = _space_to_depth(x).astype(MATMUL_DTYPE)                  # pool phases of x

    out = pl.pallas_call(
        _bn2_shortcut_kernel,
        grid=(N,),
        in_specs=[pl.BlockSpec((1, Ho, Wo, Cout), lambda n: (n, 0, 0, 0)),
                  pl.BlockSpec((1, Ho, Wo, 4 * Cin), lambda n: (n, 0, 0, 0)),
                  _full_spec((1, Cout)),
                  _full_spec((1, Cout)),
                  _full_spec((4 * Cin, Cout)),
                  _full_spec((1, Cout))],
        out_specs=pl.BlockSpec((1, Ho, Wo, Cout), lambda n: (n, 0, 0, 0)),
        out_shape=jax.ShapeDtypeStruct((N, Ho, Wo, Cout), jnp.float32),
        compiler_params=cparams,
    )(z2, x4, a2, c2, ws4, bs)

    return jnp.transpose(out, (0, 3, 1, 2))                       # back to NCHW


if __name__ == "__main__":
    key = jax.random.PRNGKey(0)
    N, Cin, H, W = 2, 4, 16, 16
    hidden_nc = Cin              # default: hidden_nc = input_nc
    Cout = 8

    ks = jax.random.split(key, 8)
    u0 = jax.random.normal(ks[6], (Cout,), jnp.float32)
    params = dict(
        w1=jax.random.normal(ks[0], (hidden_nc, Cin, 3, 3), jnp.float32) * 0.1,
        b1=jax.random.normal(ks[1], (hidden_nc,), jnp.float32) * 0.05,   # unused: cancelled by BN1
        gamma1=jnp.ones((hidden_nc,), jnp.float32),
        beta1=jnp.zeros((hidden_nc,), jnp.float32),
        w2=jax.random.normal(ks[2], (Cout, hidden_nc, 4, 4), jnp.float32) * 0.1,
        b2=jax.random.normal(ks[3], (Cout,), jnp.float32) * 0.05,        # unused: cancelled by BN2
        gamma2=jnp.ones((Cout,), jnp.float32),
        beta2=jnp.zeros((Cout,), jnp.float32),
        ws=jax.random.normal(ks[4], (Cout, Cin, 1, 1), jnp.float32) * 0.1,
        bs=jax.random.normal(ks[5], (Cout,), jnp.float32) * 0.05,
        u_s=u0 / (jnp.linalg.norm(u0) + 1e-12),   # spectral_norm persisted u vector
    )
    x = jax.random.normal(ks[7], (N, Cin, H, W), jnp.float32)

    y = jax.jit(res_block_encoder_forward)(x, params)
    jax.block_until_ready(y)
    assert y.shape == (N, Cout, H // 2, W // 2), y.shape
    assert bool(jnp.all(jnp.isfinite(y)))
    print("KERNEL_OK")
</pallas_src>

<mosaic_0001>
module attributes {stable_mosaic.version = 11 : i64} {
  func.func @_conv1_stats_kernel(%arg0: i32, %arg1: memref<1x16x16x36xbf16, #tpu.memory_space<vmem>>, %arg2: memref<1x36x4xbf16, #tpu.memory_space<vmem>>, %arg3: memref<1x16x16x4xbf16, #tpu.memory_space<vmem>>, %arg4: memref<1x1x4xf32, #tpu.memory_space<vmem>>, %arg5: memref<1x1x4xf32, #tpu.memory_space<vmem>>) attributes {dimension_semantics = [#tpu.dimension_semantics<parallel>], iteration_bounds = array<i64: 2>, scalar_prefetch = 0 : i64, scratch_operands = 0 : i64, tpu.core_type = #tpu.core_type<tc>, window_params = [{transform_indices = @transform_0, window_bounds = array<i64: 1, 16, 16, 36>}, {pipeline_mode = #tpu.pipeline_mode<synchronous>, transform_indices = @transform_1, window_bounds = array<i64: 1, 36, 4>}, {transform_indices = @transform_2, window_bounds = array<i64: 1, 16, 16, 4>}, {transform_indices = @transform_3, window_bounds = array<i64: 1, 1, 4>}, {transform_indices = @transform_4, window_bounds = array<i64: 1, 1, 4>}]} {
    %c0 = arith.constant 0 : index
    %c0_0 = arith.constant 0 : index
    %c0_1 = arith.constant 0 : index
    %c0_2 = arith.constant 0 : index
    %0 = vector.load %arg1[%c0, %c0_0, %c0_1, %c0_2] : memref<1x16x16x36xbf16, #tpu.memory_space<vmem>>, vector<1x16x16x36xbf16>
    %1 = vector.shape_cast %0 : vector<1x16x16x36xbf16> to vector<16x16x36xbf16>
    %cst = arith.constant 0.000000e+00 : f32
    %2 = vector.broadcast %cst : f32 to vector<256x4xf32>
    %3 = vector.shape_cast %1 : vector<16x16x36xbf16> to vector<256x36xbf16>
    %c0_3 = arith.constant 0 : index
    %c0_4 = arith.constant 0 : index
    %c0_5 = arith.constant 0 : index
    %4 = vector.load %arg2[%c0_3, %c0_4, %c0_5] : memref<1x36x4xbf16, #tpu.memory_space<vmem>>, vector<1x36x4xbf16>
    %5 = vector.shape_cast %4 : vector<1x36x4xbf16> to vector<36x4xbf16>
    %cst_6 = arith.constant dense<0.000000e+00> : vector<256x4xf32>
    %6 = tpu.matmul %3, %5, %cst_6 {dimension_numbers = #tpu.dot_dimension_numbers<[1], [0], [0], [1], [0, 0, 1, 1], [], []>} : vector<256x36xbf16>, vector<36x4xbf16>, vector<256x4xf32> -> vector<256x4xf32>
    %7 = arith.addf %2, %6 : vector<256x4xf32>
    %8 = vector.shape_cast %7 : vector<256x4xf32> to vector<1x16x16x4xf32>
    %9 = arith.truncf %8 : vector<1x16x16x4xf32> to vector<1x16x16x4xbf16>
    %c0_7 = arith.constant 0 : index
    %c0_8 = arith.constant 0 : index
    %c0_9 = arith.constant 0 : index
    %c0_10 = arith.constant 0 : index
    %10 = vector.load %arg3[%c0_7, %c0_8, %c0_9, %c0_10] : memref<1x16x16x4xbf16, #tpu.memory_space<vmem>>, vector<1x16x16x4xbf16>
    tpu.vector_store %arg3[%c0_7, %c0_8, %c0_9, %c0_10], %9 {strides = array<i32>} : memref<1x16x16x4xbf16, #tpu.memory_space<vmem>>, vector<1x16x16x4xbf16>,
    %cst_11 = arith.constant dense<0.000000e+00> : vector<4xf32>
    %11 = vector.multi_reduction <add>, %7, %cst_11 [0] : vector<256x4xf32> to vector<4xf32>
    %12 = vector.shape_cast %11 : vector<4xf32> to vector<1x4xf32>
    %cst_12 = arith.constant 3.906250e-03 : f32
    %13 = vector.broadcast %cst_12 : f32 to vector<1x4xf32>
    %14 = arith.mulf %12, %13 : vector<1x4xf32>
    %15 = vector.broadcast %14 : vector<1x4xf32> to vector<256x4xf32>
    %16 = arith.subf %7, %15 : vector<256x4xf32>
    %17 = arith.mulf %16, %16 : vector<256x4xf32>
    %cst_13 = arith.constant dense<0.000000e+00> : vector<4xf32>
    %18 = vector.multi_reduction <add>, %17, %cst_13 [0] : vector<256x4xf32> to vector<4xf32>
    %19 = vector.shape_cast %18 : vector<4xf32> to vector<1x4xf32>
    %20 = vector.shape_cast %12 : vector<1x4xf32> to vector<1x1x4xf32>
    %c0_14 = arith.constant 0 : index
    %c0_15 = arith.constant 0 : index
    %c0_16 = arith.constant 0 : index
    %21 = vector.load %arg4[%c0_14, %c0_15, %c0_16] : memref<1x1x4xf32, #tpu.memory_space<vmem>>, vector<1x1x4xf32>
    tpu.vector_store %arg4[%c0_14, %c0_15, %c0_16], %20 {strides = array<i32>} : memref<1x1x4xf32, #tpu.memory_space<vmem>>, vector<1x1x4xf32>,
    %22 = vector.shape_cast %19 : vector<1x4xf32> to vector<1x1x4xf32>
    %c0_17 = arith.constant 0 : index
    %c0_18 = arith.constant 0 : index
    %c0_19 = arith.constant 0 : index
    %23 = vector.load %arg5[%c0_17, %c0_18, %c0_19] : memref<1x1x4xf32, #tpu.memory_space<vmem>>, vector<1x1x4xf32>
    tpu.vector_store %arg5[%c0_17, %c0_18, %c0_19], %22 {strides = array<i32>} : memref<1x1x4xf32, #tpu.memory_space<vmem>>, vector<1x1x4xf32>,
    return
  }
  func.func @transform_0(%arg0: i32) -> (i32, i32, i32, i32) {
    %c0_i32 = arith.constant 0 : i32
    %c0_i32_0 = arith.constant 0 : i32
    %c0_i32_1 = arith.constant 0 : i32
    %c0_i32_2 = arith.constant 0 : i32
    return %arg0, %c0_i32, %c0_i32_0, %c0_i32_1 : i32, i32, i32, i32
  }
  func.func @transform_1(%arg0: i32) -> (i32, i32, i32) {
    %c0_i32 = arith.constant 0 : i32
    %c0_i32_0 = arith.constant 0 : i32
    %c0_i32_1 = arith.constant 0 : i32
    %c0_i32_2 = arith.constant 0 : i32
    return %c0_i32, %c0_i32_0, %c0_i32_1 : i32, i32, i32
  }
  func.func @transform_2(%arg0: i32) -> (i32, i32, i32, i32) {
    %c0_i32 = arith.constant 0 : i32
    %c0_i32_0 = arith.constant 0 : i32
    %c0_i32_1 = arith.constant 0 : i32
    %c0_i32_2 = arith.constant 0 : i32
    return %arg0, %c0_i32, %c0_i32_0, %c0_i32_1 : i32, i32, i32, i32
  }
  func.func @transform_3(%arg0: i32) -> (i32, i32, i32) {
    %c0_i32 = arith.constant 0 : i32
    %c0_i32_0 = arith.constant 0 : i32
    %c0_i32_1 = arith.constant 0 : i32
    return %arg0, %c0_i32, %c0_i32_0 : i32, i32, i32
  }
  func.func @transform_4(%arg0: i32) -> (i32, i32, i32) {
    %c0_i32 = arith.constant 0 : i32
    %c0_i32_0 = arith.constant 0 : i32
    %c0_i32_1 = arith.constant 0 : i32
    return %arg0, %c0_i32, %c0_i32_0 : i32, i32, i32
  }
}

module attributes {stable_mosaic.version = 11 : i64} {
  func.func @_conv2_stats_kernel(%arg0: i32, %arg1: memref<1x9x9x16xbf16, #tpu.memory_space<vmem>>, %arg2: memref<4x16x8xbf16, #tpu.memory_space<vmem>>, %arg3: memref<1x8x8x8xbf16, #tpu.memory_space<vmem>>, %arg4: memref<1x1x8xf32, #tpu.memory_space<vmem>>, %arg5: memref<1x1x8xf32, #tpu.memory_space<vmem>>) attributes {dimension_semantics = [#tpu.dimension_semantics<parallel>], iteration_bounds = array<i64: 2>, scalar_prefetch = 0 : i64, scratch_operands = 0 : i64, tpu.core_type = #tpu.core_type<tc>, window_params = [{transform_indices = @transform_0, window_bounds = array<i64: 1, 9, 9, 16>}, {pipeline_mode = #tpu.pipeline_mode<synchronous>, transform_indices = @transform_1, window_bounds = array<i64: 4, 16, 8>}, {transform_indices = @transform_2, window_bounds = array<i64: 1, 8, 8, 8>}, {transform_indices = @transform_3, window_bounds = array<i64: 1, 1, 8>}, {transform_indices = @transform_4, window_bounds = array<i64: 1, 1, 8>}]} {
    %c0 = arith.constant 0 : index
    %c0_0 = arith.constant 0 : index
    %c0_1 = arith.constant 0 : index
    %c0_2 = arith.constant 0 : index
    %0 = vector.load %arg1[%c0, %c0_0, %c0_1, %c0_2] : memref<1x9x9x16xbf16, #tpu.memory_space<vmem>>, vector<1x9x9x16xbf16>
    %1 = vector.shape_cast %0 : vector<1x9x9x16xbf16> to vector<9x9x16xbf16>
    %2 = vector.extract_strided_slice %1 {offsets = [0, 0, 0], sizes = [9, 8, 16], strides = [1, 1, 1]} : vector<9x9x16xbf16> to vector<9x8x16xbf16>
    %3 = vector.extract_strided_slice %1 {offsets = [0, 1, 0], sizes = [9, 8, 16], strides = [1, 1, 1]} : vector<9x9x16xbf16> to vector<9x8x16xbf16>
    %cst = arith.constant 0.000000e+00 : f32
    %4 = vector.broadcast %cst : f32 to vector<64x8xf32>
    %5 = vector.extract_strided_slice %2 {offsets = [0, 0, 0], sizes = [8, 8, 16], strides = [1, 1, 1]} : vector<9x8x16xbf16> to vector<8x8x16xbf16>
    %6 = vector.shape_cast %5 : vector<8x8x16xbf16> to vector<64x16xbf16>
    %c0_3 = arith.constant 0 : index
    %c0_4 = arith.constant 0 : index
    %c0_5 = arith.constant 0 : index
    %7 = vector.load %arg2[%c0_3, %c0_4, %c0_5] : memref<4x16x8xbf16, #tpu.memory_space<vmem>>, vector<1x16x8xbf16>
    %8 = vector.shape_cast %7 : vector<1x16x8xbf16> to vector<16x8xbf16>
    %cst_6 = arith.constant dense<0.000000e+00> : vector<64x8xf32>
    %9 = tpu.matmul %6, %8, %cst_6 {dimension_numbers = #tpu.dot_dimension_numbers<[1], [0], [0], [1], [0, 0, 1, 1], [], []>} : vector<64x16xbf16>, vector<16x8xbf16>, vector<64x8xf32> -> vector<64x8xf32>
    %10 = arith.addf %4, %9 : vector<64x8xf32>
    %11 = vector.extract_strided_slice %3 {offsets = [0, 0, 0], sizes = [8, 8, 16], strides = [1, 1, 1]} : vector<9x8x16xbf16> to vector<8x8x16xbf16>
    %12 = vector.shape_cast %11 : vector<8x8x16xbf16> to vector<64x16xbf16>
    %c1 = arith.constant 1 : index
    %c0_7 = arith.constant 0 : index
    %c0_8 = arith.constant 0 : index
    %13 = vector.load %arg2[%c1, %c0_7, %c0_8] : memref<4x16x8xbf16, #tpu.memory_space<vmem>>, vector<1x16x8xbf16>
    %14 = vector.shape_cast %13 : vector<1x16x8xbf16> to vector<16x8xbf16>
    %cst_9 = arith.constant dense<0.000000e+00> : vector<64x8xf32>
    %15 = tpu.matmul %12, %14, %cst_9 {dimension_numbers = #tpu.dot_dimension_numbers<[1], [0], [0], [1], [0, 0, 1, 1], [], []>} : vector<64x16xbf16>, vector<16x8xbf16>, vector<64x8xf32> -> vector<64x8xf32>
    %16 = arith.addf %10, %15 : vector<64x8xf32>
    %17 = vector.extract_strided_slice %2 {offsets = [1, 0, 0], sizes = [8, 8, 16], strides = [1, 1, 1]} : vector<9x8x16xbf16> to vector<8x8x16xbf16>
    %18 = vector.shape_cast %17 : vector<8x8x16xbf16> to vector<64x16xbf16>
    %c2 = arith.constant 2 : index
    %c0_10 = arith.constant 0 : index
    %c0_11 = arith.constant 0 : index
    %19 = vector.load %arg2[%c2, %c0_10, %c0_11] : memref<4x16x8xbf16, #tpu.memory_space<vmem>>, vector<1x16x8xbf16>
    %20 = vector.shape_cast %19 : vector<1x16x8xbf16> to vector<16x8xbf16>
    %cst_12 = arith.constant dense<0.000000e+00> : vector<64x8xf32>
    %21 = tpu.matmul %18, %20, %cst_12 {dimension_numbers = #tpu.dot_dimension_numbers<[1], [0], [0], [1], [0, 0, 1, 1], [], []>} : vector<64x16xbf16>, vector<16x8xbf16>, vector<64x8xf32> -> vector<64x8xf32>
    %22 = arith.addf %16, %21 : vector<64x8xf32>
    %23 = vector.extract_strided_slice %3 {offsets = [1, 0, 0], sizes = [8, 8, 16], strides = [1, 1, 1]} : vector<9x8x16xbf16> to vector<8x8x16xbf16>
    %24 = vector.shape_cast %23 : vector<8x8x16xbf16> to vector<64x16xbf16>
    %c3 = arith.constant 3 : index
    %c0_13 = arith.constant 0 : index
    %c0_14 = arith.constant 0 : index
    %25 = vector.load %arg2[%c3, %c0_13, %c0_14] : memref<4x16x8xbf16, #tpu.memory_space<vmem>>, vector<1x16x8xbf16>
    %26 = vector.shape_cast %25 : vector<1x16x8xbf16> to vector<16x8xbf16>
    %cst_15 = arith.constant dense<0.000000e+00> : vector<64x8xf32>
    %27 = tpu.matmul %24, %26, %cst_15 {dimension_numbers = #tpu.dot_dimension_numbers<[1], [0], [0], [1], [0, 0, 1, 1], [], []>} : vector<64x16xbf16>, vector<16x8xbf16>, vector<64x8xf32> -> vector<64x8xf32>
    %28 = arith.addf %22, %27 : vector<64x8xf32>
    %29 = vector.shape_cast %28 : vector<64x8xf32> to vector<1x8x8x8xf32>
    %30 = arith.truncf %29 : vector<1x8x8x8xf32> to vector<1x8x8x8xbf16>
    %c0_16 = arith.constant 0 : index
    %c0_17 = arith.constant 0 : index
    %c0_18 = arith.constant 0 : index
    %c0_19 = arith.constant 0 : index
    %31 = vector.load %arg3[%c0_16, %c0_17, %c0_18, %c0_19] : memref<1x8x8x8xbf16, #tpu.memory_space<vmem>>, vector<1x8x8x8xbf16>
    tpu.vector_store %arg3[%c0_16, %c0_17, %c0_18, %c0_19], %30 {strides = array<i32>} : memref<1x8x8x8xbf16, #tpu.memory_space<vmem>>, vector<1x8x8x8xbf16>,
    %cst_20 = arith.constant dense<0.000000e+00> : vector<8xf32>
    %32 = vector.multi_reduction <add>, %28, %cst_20 [0] : vector<64x8xf32> to vector<8xf32>
    %33 = vector.shape_cast %32 : vector<8xf32> to vector<1x8xf32>
    %cst_21 = arith.constant 1.562500e-02 : f32
    %34 = vector.broadcast %cst_21 : f32 to vector<1x8xf32>
    %35 = arith.mulf %33, %34 : vector<1x8xf32>
    %36 = vector.broadcast %35 : vector<1x8xf32> to vector<64x8xf32>
    %37 = arith.subf %28, %36 : vector<64x8xf32>
    %38 = arith.mulf %37, %37 : vector<64x8xf32>
    %cst_22 = arith.constant dense<0.000000e+00> : vector<8xf32>
    %39 = vector.multi_reduction <add>, %38, %cst_22 [0] : vector<64x8xf32> to vector<8xf32>
    %40 = vector.shape_cast %39 : vector<8xf32> to vector<1x8xf32>
    %41 = vector.shape_cast %33 : vector<1x8xf32> to vector<1x1x8xf32>
    %c0_23 = arith.constant 0 : index
    %c0_24 = arith.constant 0 : index
    %c0_25 = arith.constant 0 : index
    %42 = vector.load %arg4[%c0_23, %c0_24, %c0_25] : memref<1x1x8xf32, #tpu.memory_space<vmem>>, vector<1x1x8xf32>
    tpu.vector_store %arg4[%c0_23, %c0_24, %c0_25], %41 {strides = array<i32>} : memref<1x1x8xf32, #tpu.memory_space<vmem>>, vector<1x1x8xf32>,
    %43 = vector.shape_cast %40 : vector<1x8xf32> to vector<1x1x8xf32>
    %c0_26 = arith.constant 0 : index
    %c0_27 = arith.constant 0 : index
    %c0_28 = arith.constant 0 : index
    %44 = vector.load %arg5[%c0_26, %c0_27, %c0_28] : memref<1x1x8xf32, #tpu.memory_space<vmem>>, vector<1x1x8xf32>
    tpu.vector_store %arg5[%c0_26, %c0_27, %c0_28], %43 {strides = array<i32>} : memref<1x1x8xf32, #tpu.memory_space<vmem>>, vector<1x1x8xf32>,
    return
  }
  func.func @transform_0(%arg0: i32) -> (i32, i32, i32, i32) {
    %c0_i32 = arith.constant 0 : i32
    %c0_i32_0 = arith.constant 0 : i32
    %c0_i32_1 = arith.constant 0 : i32
    %c0_i32_2 = arith.constant 0 : i32
    return %arg0, %c0_i32, %c0_i32_0, %c0_i32_1 : i32, i32, i32, i32
  }
  func.func @transform_1(%arg0: i32) -> (i32, i32, i32) {
    %c0_i32 = arith.constant 0 : i32
    %c0_i32_0 = arith.constant 0 : i32
    %c0_i32_1 = arith.constant 0 : i32
    %c0_i32_2 = arith.constant 0 : i32
    return %c0_i32, %c0_i32_0, %c0_i32_1 : i32, i32, i32
  }
  func.func @transform_2(%arg0: i32) -> (i32, i32, i32, i32) {
    %c0_i32 = arith.constant 0 : i32
    %c0_i32_0 = arith.constant 0 : i32
    %c0_i32_1 = arith.constant 0 : i32
    %c0_i32_2 = arith.constant 0 : i32
    return %arg0, %c0_i32, %c0_i32_0, %c0_i32_1 : i32, i32, i32, i32
  }
  func.func @transform_3(%arg0: i32) -> (i32, i32, i32) {
    %c0_i32 = arith.constant 0 : i32
    %c0_i32_0 = arith.constant 0 : i32
    %c0_i32_1 = arith.constant 0 : i32
    return %arg0, %c0_i32, %c0_i32_0 : i32, i32, i32
  }
  func.func @transform_4(%arg0: i32) -> (i32, i32, i32) {
    %c0_i32 = arith.constant 0 : i32
    %c0_i32_0 = arith.constant 0 : i32
    %c0_i32_1 = arith.constant 0 : i32
    return %arg0, %c0_i32, %c0_i32_0 : i32, i32, i32
  }
}

module attributes {stable_mosaic.version = 11 : i64} {
  func.func @_bn2_shortcut_kernel(%arg0: i32, %arg1: memref<1x8x8x8xbf16, #tpu.memory_space<vmem>>, %arg2: memref<1x8x8x16xbf16, #tpu.memory_space<vmem>>, %arg3: memref<1x8xf32, #tpu.memory_space<vmem>>, %arg4: memref<1x8xf32, #tpu.memory_space<vmem>>, %arg5: memref<16x8xbf16, #tpu.memory_space<vmem>>, %arg6: memref<1x8xf32, #tpu.memory_space<vmem>>, %arg7: memref<1x8x8x8xf32, #tpu.memory_space<vmem>>) attributes {dimension_semantics = [#tpu.dimension_semantics<parallel>], iteration_bounds = array<i64: 2>, scalar_prefetch = 0 : i64, scratch_operands = 0 : i64, tpu.core_type = #tpu.core_type<tc>, window_params = [{transform_indices = @transform_0, window_bounds = array<i64: 1, 8, 8, 8>}, {transform_indices = @transform_1, window_bounds = array<i64: 1, 8, 8, 16>}, {pipeline_mode = #tpu.pipeline_mode<synchronous>, transform_indices = @transform_2, window_bounds = array<i64: 1, 8>}, {pipeline_mode = #tpu.pipeline_mode<synchronous>, transform_indices = @transform_3, window_bounds = array<i64: 1, 8>}, {pipeline_mode = #tpu.pipeline_mode<synchronous>, transform_indices = @transform_4, window_bounds = array<i64: 16, 8>}, {pipeline_mode = #tpu.pipeline_mode<synchronous>, transform_indices = @transform_5, window_bounds = array<i64: 1, 8>}, {transform_indices = @transform_6, window_bounds = array<i64: 1, 8, 8, 8>}]} {
    %c0 = arith.constant 0 : index
    %c0_0 = arith.constant 0 : index
    %c0_1 = arith.constant 0 : index
    %c0_2 = arith.constant 0 : index
    %0 = vector.load %arg2[%c0, %c0_0, %c0_1, %c0_2] : memref<1x8x8x16xbf16, #tpu.memory_space<vmem>>, vector<1x8x8x16xbf16>
    %1 = vector.shape_cast %0 : vector<1x8x8x16xbf16> to vector<8x8x16xbf16>
    %2 = vector.shape_cast %1 : vector<8x8x16xbf16> to vector<64x16xbf16>
    %c0_3 = arith.constant 0 : index
    %c0_4 = arith.constant 0 : index
    %3 = vector.load %arg5[%c0_3, %c0_4] : memref<16x8xbf16, #tpu.memory_space<vmem>>, vector<16x8xbf16>
    %cst = arith.constant dense<0.000000e+00> : vector<64x8xf32>
    %4 = tpu.matmul %2, %3, %cst {dimension_numbers = #tpu.dot_dimension_numbers<[1], [0], [0], [1], [0, 0, 1, 1], [], []>} : vector<64x16xbf16>, vector<16x8xbf16>, vector<64x8xf32> -> vector<64x8xf32>
    %c0_5 = arith.constant 0 : index
    %c0_6 = arith.constant 0 : index
    %5 = vector.load %arg6[%c0_5, %c0_6] : memref<1x8xf32, #tpu.memory_space<vmem>>, vector<1x8xf32>
    %6 = vector.broadcast %5 : vector<1x8xf32> to vector<64x8xf32>
    %7 = arith.addf %4, %6 : vector<64x8xf32>
    %c0_7 = arith.constant 0 : index
    %c0_8 = arith.constant 0 : index
    %c0_9 = arith.constant 0 : index
    %c0_10 = arith.constant 0 : index
    %8 = vector.load %arg1[%c0_7, %c0_8, %c0_9, %c0_10] : memref<1x8x8x8xbf16, #tpu.memory_space<vmem>>, vector<1x8x8x8xbf16>
    %9 = vector.shape_cast %8 : vector<1x8x8x8xbf16> to vector<8x8x8xbf16>
    %10 = arith.extf %9 : vector<8x8x8xbf16> to vector<8x8x8xf32>
    %11 = vector.shape_cast %10 : vector<8x8x8xf32> to vector<64x8xf32>
    %c0_11 = arith.constant 0 : index
    %c0_12 = arith.constant 0 : index
    %12 = vector.load %arg3[%c0_11, %c0_12] : memref<1x8xf32, #tpu.memory_space<vmem>>, vector<1x8xf32>
    %13 = vector.broadcast %12 : vector<1x8xf32> to vector<64x8xf32>
    %14 = arith.mulf %11, %13 : vector<64x8xf32>
    %c0_13 = arith.constant 0 : index
    %c0_14 = arith.constant 0 : index
    %15 = vector.load %arg4[%c0_13, %c0_14] : memref<1x8xf32, #tpu.memory_space<vmem>>, vector<1x8xf32>
    %16 = vector.broadcast %15 : vector<1x8xf32> to vector<64x8xf32>
    %17 = arith.addf %14, %16 : vector<64x8xf32>
    %18 = arith.addf %17, %7 : vector<64x8xf32>
    %19 = vector.shape_cast %18 : vector<64x8xf32> to vector<1x8x8x8xf32>
    %c0_15 = arith.constant 0 : index
    %c0_16 = arith.constant 0 : index
    %c0_17 = arith.constant 0 : index
    %c0_18 = arith.constant 0 : index
    %20 = vector.load %arg7[%c0_15, %c0_16, %c0_17, %c0_18] : memref<1x8x8x8xf32, #tpu.memory_space<vmem>>, vector<1x8x8x8xf32>
    tpu.vector_store %arg7[%c0_15, %c0_16, %c0_17, %c0_18], %19 {strides = array<i32>} : memref<1x8x8x8xf32, #tpu.memory_space<vmem>>, vector<1x8x8x8xf32>,
    return
  }
  func.func @transform_0(%arg0: i32) -> (i32, i32, i32, i32) {
    %c0_i32 = arith.constant 0 : i32
    %c0_i32_0 = arith.constant 0 : i32
    %c0_i32_1 = arith.constant 0 : i32
    %c0_i32_2 = arith.constant 0 : i32
    return %arg0, %c0_i32, %c0_i32_0, %c0_i32_1 : i32, i32, i32, i32
  }
  func.func @transform_1(%arg0: i32) -> (i32, i32, i32, i32) {
    %c0_i32 = arith.constant 0 : i32
    %c0_i32_0 = arith.constant 0 : i32
    %c0_i32_1 = arith.constant 0 : i32
    %c0_i32_2 = arith.constant 0 : i32
    return %arg0, %c0_i32, %c0_i32_0, %c0_i32_1 : i32, i32, i32, i32
  }
  func.func @transform_2(%arg0: i32) -> (i32, i32) {
    %c0_i32 = arith.constant 0 : i32
    %c0_i32_0 = arith.constant 0 : i32
    %c0_i32_1 = arith.constant 0 : i32
    return %c0_i32, %c0_i32_0 : i32, i32
  }
  func.func @transform_3(%arg0: i32) -> (i32, i32) {
    %c0_i32 = arith.constant 0 : i32
    %c0_i32_0 = arith.constant 0 : i32
    %c0_i32_1 = arith.constant 0 : i32
    return %c0_i32, %c0_i32_0 : i32, i32
  }
  func.func @transform_4(%arg0: i32) -> (i32, i32) {
    %c0_i32 = arith.constant 0 : i32
    %c0_i32_0 = arith.constant 0 : i32
    %c0_i32_1 = arith.constant 0 : i32
    return %c0_i32, %c0_i32_0 : i32, i32
  }
  func.func @transform_5(%arg0: i32) -> (i32, i32) {
    %c0_i32 = arith.constant 0 : i32
    %c0_i32_0 = arith.constant 0 : i32
    %c0_i32_1 = arith.constant 0 : i32
    return %c0_i32, %c0_i32_0 : i32, i32
  }
  func.func @transform_6(%arg0: i32) -> (i32, i32, i32, i32) {
    %c0_i32 = arith.constant 0 : i32
    %c0_i32_0 = arith.constant 0 : i32
    %c0_i32_1 = arith.constant 0 : i32
    %c0_i32_2 = arith.constant 0 : i32
    return %arg0, %c0_i32, %c0_i32_0, %c0_i32_1 : i32, i32, i32, i32
  }
}

</mosaic_0001>

<llo_original>
// kernel: res_block_encoder_forward.3
$region0: #{res_block_encoder_forward.3}
  #allocation0 [shape = 'u32[]', space=smem, size = 0x4, offset = 0x4, fixed_abs, tag = 'smem constant byte address 0x4 - core index']
  #allocation1 [shape = 'u32[72,128]{1,0:T(1,128)}', space=vmem, size = 0x9000, scoped, tag = 'internal scratch']
  %s0 = inlined_call_operand.vmem [shape: bf16[2,16,16,36], index: 0, kind: input, shape index: {}]
  %s1 = inlined_call_operand.vmem [shape: bf16[1,36,4], index: 1, kind: input, shape index: {}]
  %s2 = inlined_call_operand.vmem [shape: bf16[2,16,16,4], index: 2, kind: output, shape index: {0}]
  %s3 = inlined_call_operand.vmem [shape: f32[2,1,4], index: 3, kind: output, shape index: {1}]
  %s4 = inlined_call_operand.vmem [shape: f32[2,1,4], index: 4, kind: output, shape index: {2}]
  %5 = xla_tuple %s2, %s3, %s4
  %s6 = sld [smem:[#allocation0]]
  $region57: #{res_block_encoder_forward.3} parent=0
    _
  %s8 = ssub.s32 1, %s6
  %s9 = scalar_select 0, %s8, %s6
  loop: start=0, step=1, limit=4
  $region2: #{res_block_encoder_forward.3} parent=0 // loop_pre_header
    _
  $region3: #{res_block_encoder_forward.3} parent=0 // loop_header
    %s11 = sphi 0, %s15
    %p12 = scmp.ge.s32.totalorder %s11, 4
    %s21 = sphi 0, %s23
    %s24 = sphi 0, %s21
    %s25 = sphi 0, %s24
    %s41 = sphi 0, %s25
    %s45 = sphi 0, %s45
    %s47 = sphi 0, %s45
    %s48 = sphi 0, %s47
    %s62 = sphi 0, %s48
    %s68 = sphi 0, %s70
    %s71 = sphi 0, %s68
    %s72 = sphi 0, %s71
    %s88 = sphi 0, %s72
    %s94 = sphi 0, %s96
    %s97 = sphi 0, %s94
    %s98 = sphi 0, %s97
    %s114 = sphi 0, %s98
    %s120 = sphi 0, %s122
    %s123 = sphi 0, %s120
    %s124 = sphi 0, %s123
    %s140 = sphi 0, %s124
  $region4: #{res_block_encoder_forward.3} parent=0 // loop_header_branch
    %14 = sbr.rel (%p12) target = $region8
  $region5: #{res_block_encoder_forward.3} parent=0 // loop_body
    %s16 = ssub.s32 %s11, 1
    %s17 = ssub.s32 %s11, 2
    %s18 = sadd.s32 %s11, 1
    %s19 = ssub.s32 %s11, %s18
    %p20 = scmp.eq.s32.totalorder %s19, 0
    %s22 = sadd.s32 %s21, 1
    %s23 = scalar_select %p20, %s21, %s22
    %p26 = pneg %p20
    %p27 = scmp.eq.s32.totalorder %s11, 1
    %p28 = por %p26, %p27
    %p29 = scmp.ne.s32.totalorder %s21, %s24
    %p30 = scmp.eq.s32.totalorder %s11, 0
    %p31 = por %p29, %p30
    %p32 = scmp.ne.s32.totalorder %s21, %s24
    %p33 = scmp.eq.s32.totalorder %s16, 1
    %p34 = por %p32, %p33
    %p35 = scmp.ne.s32.totalorder %s24, %s25
    %p36 = scmp.eq.s32.totalorder %s16, 0
    %p37 = por %p35, %p36
    %p38 = scmp.ne.s32.totalorder %s24, %s25
    %p39 = scmp.eq.s32.totalorder %s17, 1
    %p40 = por %p38, %p39
    %p42 = scmp.ne.s32.totalorder %s25, %s41
    %p43 = scmp.eq.s32.totalorder %s17, 0
    %p44 = por %p42, %p43
    %s46 = sadd.s32 %s45, 1
    %p49 = scmp.eq.s32.totalorder %s11, 1
    %p50 = scmp.ne.s32.totalorder %s45, %s47
    %p51 = scmp.eq.s32.totalorder %s11, 0
    %p52 = por %p50, %p51
    %p53 = scmp.ne.s32.totalorder %s45, %s47
    %p54 = scmp.eq.s32.totalorder %s16, 1
    %p55 = por %p53, %p54
    %p56 = scmp.ne.s32.totalorder %s47, %s48
    %p57 = scmp.eq.s32.totalorder %s16, 0
    %p58 = por %p56, %p57
    %p59 = scmp.ne.s32.totalorder %s47, %s48
    %p60 = scmp.eq.s32.totalorder %s17, 1
    %p61 = por %p59, %p60
    %p63 = scmp.ne.s32.totalorder %s48, %s62
    %p64 = scmp.eq.s32.totalorder %s17, 0
    %p65 = por %p63, %p64
    %s66 = ssub.s32 %s11, %s18
    %p67 = scmp.eq.s32.totalorder %s66, 0
    %s69 = sadd.s32 %s68, 1
    %s70 = scalar_select %p67, %s68, %s69
    %p73 = pneg %p67
    %p74 = scmp.eq.s32.totalorder %s11, 1
    %p75 = por %p73, %p74
    %p76 = scmp.ne.s32.totalorder %s68, %s71
    %p77 = scmp.eq.s32.totalorder %s11, 0
    %p78 = por %p76, %p77
    %p79 = scmp.ne.s32.totalorder %s68, %s71
    %p80 = scmp.eq.s32.totalorder %s16, 1
    %p81 = por %p79, %p80
    %p82 = scmp.ne.s32.totalorder %s71, %s72
    %p83 = scmp.eq.s32.totalorder %s16, 0
    %p84 = por %p82, %p83
    %p85 = scmp.ne.s32.totalorder %s71, %s72
    %p86 = scmp.eq.s32.totalorder %s17, 1
    %p87 = por %p85, %p86
    %p89 = scmp.ne.s32.totalorder %s72, %s88
    %p90 = scmp.eq.s32.totalorder %s17, 0
    %p91 = por %p89, %p90
    %s92 = ssub.s32 %s11, %s18
    %p93 = scmp.eq.s32.totalorder %s92, 0
    %s95 = sadd.s32 %s94, 1
    %s96 = scalar_select %p93, %s94, %s95
    %p99 = pneg %p93
    %p100 = scmp.eq.s32.totalorder %s11, 1
    %p101 = por %p99, %p100
    %p102 = scmp.ne.s32.totalorder %s94, %s97
    %p103 = scmp.eq.s32.totalorder %s11, 0
    %p104 = por %p102, %p103
    %p105 = scmp.ne.s32.totalorder %s94, %s97
    %p106 = scmp.eq.s32.totalorder %s16, 1
    %p107 = por %p105, %p106
    %p108 = scmp.ne.s32.totalorder %s97, %s98
    %p109 = scmp.eq.s32.totalorder %s16, 0
    %p110 = por %p108, %p109
    %p111 = scmp.ne.s32.totalorder %s97, %s98
    %p112 = scmp.eq.s32.totalorder %s17, 1
    %p113 = por %p111, %p112
    %p115 = scmp.ne.s32.totalorder %s98, %s114
    %p116 = scmp.eq.s32.totalorder %s17, 0
    %p117 = por %p115, %p116
    %s118 = ssub.s32 %s11, %s18
    %p119 = scmp.eq.s32.totalorder %s118, 0
    %s121 = sadd.s32 %s120, 1
    %s122 = scalar_select %p119, %s120, %s121
    %p125 = pneg %p119
    %p126 = scmp.eq.s32.totalorder %s11, 1
    %p127 = por %p125, %p126
    %p128 = scmp.ne.s32.totalorder %s120, %s123
    %p129 = scmp.eq.s32.totalorder %s11, 0
    %p130 = por %p128, %p129
    %p131 = scmp.ne.s32.totalorder %s120, %s123
    %p132 = scmp.eq.s32.totalorder %s16, 1
    %p133 = por %p131, %p132
    %p134 = scmp.ne.s32.totalorder %s123, %s124
    %p135 = scmp.eq.s32.totalorder %s16, 0
    %p136 = por %p134, %p135
    %p137 = scmp.ne.s32.totalorder %s123, %s124
    %p138 = scmp.eq.s32.totalorder %s17, 1
    %p139 = por %p137, %p138
    %p141 = scmp.ne.s32.totalorder %s124, %s140
    %p142 = scmp.eq.s32.totalorder %s17, 0
    %p143 = por %p141, %p142
    %p144 = scmp.le.s32.totalorder 1, %s11
    %p145 = scmp.lt.s32.totalorder %s11, 3
    %p146 = pnand %p144, %p145
    %p147 = pneg %p146
    // Predicated region
    $region9: #{res_block_encoder_forward.3} parent=5 // pred_check
      _
    $region10: #{res_block_encoder_forward.3} parent=5 // pred_check_branch
      %149 = sbr.rel (%p146) target = $region12
    $region11: #{res_block_encoder_forward.3} parent=5 // pred_region
      %s150 = ssub.s32 %s11, 1
      // Predicated region
      $region13: #{res_block_encoder_forward.3} parent=11 // pred_check
        %p151 = pneg %p58
      $region14: #{res_block_encoder_forward.3} parent=11 // pred_check_branch
        %153 = sbr.rel (%p151) target = $region16
      $region15: #{res_block_encoder_forward.3} parent=11 // pred_region
        _
      $region16: #{res_block_encoder_forward.3} parent=11 // pred_fallthru
        _
    $region12: #{res_block_encoder_forward.3} parent=5 // pred_fallthru
      _
    %p154 = scmp.lt.s32.totalorder %s11, 2
    // Predicated region
    $region17: #{res_block_encoder_forward.3} parent=5 // pred_check
      %p155 = pneg %p154
    $region18: #{res_block_encoder_forward.3} parent=5 // pred_check_branch
      %157 = sbr.rel (%p155) target = $region20
    $region19: #{res_block_encoder_forward.3} parent=5 // pred_region
      // Predicated region
      $region21: #{res_block_encoder_forward.3} parent=19 // pred_check
        %p158 = pneg %p31
      $region22: #{res_block_encoder_forward.3} parent=19 // pred_check_branch
        %160 = sbr.rel (%p158) target = $region24
      $region23: #{res_block_encoder_forward.3} parent=19 // pred_region
        %p161 = scmp.lt.s32.totalorder %s11, 1
        %s162 = scalar_select %p161, %s11, 1
        %s163 = smul.addr %s162, 32
        %s164 = smul.addr %s163, 4
        %s165 = scalar_lea.vmem %s0, %s164
      $region24: #{res_block_encoder_forward.3} parent=19 // pred_fallthru
        _
    $region20: #{res_block_encoder_forward.3} parent=5 // pred_fallthru
      _
    %p166 = scmp.le.s32.totalorder 1, %s11
    %p167 = scmp.lt.s32.totalorder %s11, 3
    %p168 = pnand %p166, %p167
    %p169 = pneg %p168
    // Predicated region
    $region25: #{res_block_encoder_forward.3} parent=5 // pred_check
      _
    $region26: #{res_block_encoder_forward.3} parent=5 // pred_check_branch
      %171 = sbr.rel (%p168) target = $region28
    $region27: #{res_block_encoder_forward.3} parent=5 // pred_region
      %s172 = ssub.s32 %s11, 1
      %p173 = scmp.lt.s32.totalorder %s16, 1
      %s174 = scalar_select %p173, %s16, 1
      %s175 = smul.addr %s174, 32
      %s176 = smul.addr %s175, 4
      %s177 = scalar_lea.vmem %s0, %s176
      %p178 = pneg %p37
      %p179 = pneg %p34
      %p180 = pneg %p58
      %p181 = pneg %p55
      %p182 = pneg %p84
      %p183 = pneg %p81
      %p184 = scmp.lt.s32.totalorder %s16, 1
      %s185 = scalar_select %p184, %s16, 1
      %s186 = smul.addr %s185, 32
      %s187 = smul.addr %s186, 4
      %s188 = scalar_lea.vmem %s2, %s187
      %p189 = pneg %p110
      %p190 = pneg %p107
      %p191 = scmp.lt.s32.totalorder %s16, 1
      %s192 = scalar_select %p191, %s16, 1
      %s193 = scalar_lea.vmem %s3, %s192
      %p194 = pneg %p136
      %p195 = pneg %p133
      %p196 = scmp.lt.s32.totalorder %s16, 1
      %s197 = scalar_select %p196, %s16, 1
      %s198 = scalar_lea.vmem %s4, %s197
      %p199 = scmp.lt.s32.totalorder %s16, 1
      %s200 = scalar_select %p199, %s16, 1
      %s201 = smul.addr %s200, 32
      %s202 = smul.addr %s201, 4
      %s203 = scalar_lea.vmem %s0, %s202
      %p204 = scmp.lt.s32.totalorder %s16, 1
      %s205 = scalar_select %p204, %s16, 1
      %s206 = smul.addr %s205, 32
      %s207 = smul.addr %s206, 4
      %s208 = scalar_lea.vmem %s2, %s207
      %p209 = scmp.lt.s32.totalorder %s16, 1
      %s210 = scalar_select %p209, %s16, 1
      %s211 = scalar_lea.vmem %s3, %s210
      %p212 = scmp.lt.s32.totalorder %s16, 1
      %s213 = scalar_select %p212, %s16, 1
      %s214 = scalar_lea.vmem %s4, %s213
      %v216 = vld [vmem:[%s203] sm:$0xf]
      %v217 = vld [vmem:[%s203 + $0x4] sm:$0xf]
      %v218 = vld [vmem:[%s203 + $0x8] sm:$0xf]
      %v219 = vld [vmem:[%s203 + $0xc] sm:$0xf]
      %v220 = vld [vmem:[%s203 + $0x10] sm:$0xf]
      %v221 = vld [vmem:[%s203 + $0x14] sm:$0xf]
      %v222 = vld [vmem:[%s203 + $0x18] sm:$0xf]
      %v223 = vld [vmem:[%s203 + $0x1c] sm:$0xf]
      %v224 = vld [vmem:[%s203 + $0x20] sm:$0xf]
      %v225 = vld [vmem:[%s203 + $0x24] sm:$0xf]
      %v226 = vld [vmem:[%s203 + $0x28] sm:$0xf]
      %v227 = vld [vmem:[%s203 + $0x2c] sm:$0xf]
      %v228 = vld [vmem:[%s203 + $0x30] sm:$0xf]
      %v229 = vld [vmem:[%s203 + $0x34] sm:$0xf]
      %v230 = vld [vmem:[%s203 + $0x38] sm:$0xf]
      %v231 = vld [vmem:[%s203 + $0x3c] sm:$0xf]
      %v232 = vld [vmem:[%s203 + $0x40] sm:$0xf]
      %v233 = vld [vmem:[%s203 + $0x44] sm:$0xf]
      %v234 = vld [vmem:[%s203 + $0x48] sm:$0xf]
      %v235 = vld [vmem:[%s203 + $0x4c] sm:$0xf]
      %v236 = vld [vmem:[%s203 + $0x50] sm:$0xf]
      %v237 = vld [vmem:[%s203 + $0x54] sm:$0xf]
      %v238 = vld [vmem:[%s203 + $0x58] sm:$0xf]
      %v239 = vld [vmem:[%s203 + $0x5c] sm:$0xf]
      %v240 = vld [vmem:[%s203 + $0x60] sm:$0xf]
      %v241 = vld [vmem:[%s203 + $0x64] sm:$0xf]
      %v242 = vld [vmem:[%s203 + $0x68] sm:$0xf]
      %v243 = vld [vmem:[%s203 + $0x6c] sm:$0xf]
      %v244 = vld [vmem:[%s203 + $0x70] sm:$0xf]
      %v245 = vld [vmem:[%s203 + $0x74] sm:$0xf]
      %v246 = vld [vmem:[%s203 + $0x78] sm:$0xf]
      %v247 = vld [vmem:[%s203 + $0x7c] sm:$0xf]
      %v248 = vld [vmem:[%s1] sm:$0xf]
      %v249 = vld [vmem:[%s1 + $0x4] sm:$0xf]
      %v250 = vld [vmem:[%s1 + $0x8] sm:$0xf]
      %v251 = vld [vmem:[%s1 + $0xc] sm:$0xf]
      %v252 = vld [vmem:[%s1 + $0x10] sm:$0x3]
      %v285 = vunpack.c.l.b16 %v216
      %v286 = vunpack.c.l.b16 %v217
      %v287 = vunpack.c.l.b16 %v218
      %v288 = vunpack.c.l.b16 %v219
      %v289 = vunpack.c.l.b16 %v220
      %v290 = vunpack.c.l.b16 %v221
      %v291 = vunpack.c.l.b16 %v222
      %v292 = vunpack.c.l.b16 %v223
      %v293 = vunpack.c.l.b16 %v224
      %v294 = vunpack.c.l.b16 %v225
      %v295 = vunpack.c.l.b16 %v226
      %v296 = vunpack.c.l.b16 %v227
      %v297 = vunpack.c.l.b16 %v228
      %v298 = vunpack.c.l.b16 %v229
      %v299 = vunpack.c.l.b16 %v230
      %v300 = vunpack.c.l.b16 %v231
      %v301 = vunpack.c.l.b16 %v232
      %v302 = vunpack.c.l.b16 %v233
      %v303 = vunpack.c.l.b16 %v234
      %v304 = vunpack.c.l.b16 %v235
      %v305 = vunpack.c.l.b16 %v236
      %v306 = vunpack.c.l.b16 %v237
      %v307 = vunpack.c.l.b16 %v238
      %v308 = vunpack.c.l.b16 %v239
      %v309 = vunpack.c.l.b16 %v240
      %v310 = vunpack.c.l.b16 %v241
      %v311 = vunpack.c.l.b16 %v242
      %v312 = vunpack.c.l.b16 %v243
      %v313 = vunpack.c.l.b16 %v244
      %v314 = vunpack.c.l.b16 %v245
      %v315 = vunpack.c.l.b16 %v246
      %v316 = vunpack.c.l.b16 %v247
      %v317 = vpack.c.b16 %v286, %v285
      %v318 = vpack.c.b16 %v288, %v287
      %v319 = vpack.c.b16 %v290, %v289
      %v320 = vpack.c.b16 %v292, %v291
      %v321 = vpack.c.b16 %v294, %v293
      %v322 = vpack.c.b16 %v296, %v295
      %v323 = vpack.c.b16 %v298, %v297
      %v324 = vpack.c.b16 %v300, %v299
      %v325 = vpack.c.b16 %v302, %v301
      %v326 = vpack.c.b16 %v304, %v303
      %v327 = vpack.c.b16 %v306, %v305
      %v328 = vpack.c.b16 %v308, %v307
      %v329 = vpack.c.b16 %v310, %v309
      %v330 = vpack.c.b16 %v312, %v311
      %v331 = vpack.c.b16 %v314, %v313
      %v332 = vpack.c.b16 %v316, %v315
      %v338 = vunpack.c.l.b16 %v248
      %v339 = vunpack.c.l.b16 %v249
      %v340 = vunpack.c.l.b16 %v250
      %v341 = vunpack.c.l.b16 %v251
      %v342 = vunpack.c.l.b16 %v252
      %v343 = vpack.c.b16 %v339, %v338
      %v344 = vpack.c.b16 %v341, %v340
      %v345 = vpack.c.b16 %v342, %v342
      %vm348 = vcmask 293888
      %v350 = vsel %vm348, %v317, 0
      %v353 = vsel %vm348, %v318, 0
      %v356 = vsel %vm348, %v319, 0
      %v359 = vsel %vm348, %v320, 0
      %v362 = vsel %vm348, %v321, 0
      %v365 = vsel %vm348, %v322, 0
      %v368 = vsel %vm348, %v323, 0
      %v371 = vsel %vm348, %v324, 0
      %v374 = vsel %vm348, %v325, 0
      %v377 = vsel %vm348, %v326, 0
      %v380 = vsel %vm348, %v327, 0
      %v383 = vsel %vm348, %v328, 0
      %v386 = vsel %vm348, %v329, 0
      %v389 = vsel %vm348, %v330, 0
      %v392 = vsel %vm348, %v331, 0
      %v395 = vsel %vm348, %v332, 0
      %vm397 = vcmask 1041408
      %v399 = vsel %vm397, %v345, 0
      %401 = vmatpush.bf16.msra.mxu0 0
      %402 = vmatpush.bf16.msra.mxu0 0
      %403 = vmatpush.bf16.msra.mxu0 0
      %404 = vmatpush.bf16.msra.mxu0 0
      %405 = vmatpush.bf16.msra.mxu0 0
      %406 = vmatpush.bf16.msra.mxu0 %v399
      %407 = vmatpush.bf16.msra.mxu0 %v344
      %408 = vmatpush.bf16.msra.mxu0 %v343
      %409 = vmatmul.bf16.gmra.mxu0 %v350
      %v410 = vpop.f32.mrf.mxu0
      %v411 = vadd.f32 0.0, %v410
      %v412 = vpop.f32.mrf.mxu0
      %v413 = vadd.f32 0.0, %v412
      %414 = vmatmul.bf16.gmra.mxu0 %v353
      %v415 = vpop.f32.mrf.mxu0
      %v416 = vadd.f32 0.0, %v415
      %v417 = vpop.f32.mrf.mxu0
      %v418 = vadd.f32 0.0, %v417
      %419 = vmatmul.bf16.gmra.mxu0 %v356
      %v420 = vpop.f32.mrf.mxu0
      %v421 = vadd.f32 0.0, %v420
      %v422 = vpop.f32.mrf.mxu0
      %v423 = vadd.f32 0.0, %v422
      %424 = vmatmul.bf16.gmra.mxu0 %v359
      %v425 = vpop.f32.mrf.mxu0
      %v426 = vadd.f32 0.0, %v425
      %v427 = vpop.f32.mrf.mxu0
      %v428 = vadd.f32 0.0, %v427
      %429 = vmatmul.bf16.gmra.mxu0 %v362
      %v430 = vpop.f32.mrf.mxu0
      %v431 = vadd.f32 0.0, %v430
      %v432 = vpop.f32.mrf.mxu0
      %v433 = vadd.f32 0.0, %v432
      %434 = vmatmul.bf16.gmra.mxu0 %v365
      %v435 = vpop.f32.mrf.mxu0
      %v436 = vadd.f32 0.0, %v435
      %v437 = vpop.f32.mrf.mxu0
      %v438 = vadd.f32 0.0, %v437
      %439 = vmatmul.bf16.gmra.mxu0 %v368
      %v440 = vpop.f32.mrf.mxu0
      %v441 = vadd.f32 0.0, %v440
      %v442 = vpop.f32.mrf.mxu0
      %v443 = vadd.f32 0.0, %v442
      %444 = vmatmul.bf16.gmra.mxu0 %v371
      %v445 = vpop.f32.mrf.mxu0
      %v446 = vadd.f32 0.0, %v445
      %v447 = vpop.f32.mrf.mxu0
      %v448 = vadd.f32 0.0, %v447
      %449 = vmatmul.bf16.gmra.mxu0 %v374
      %v450 = vpop.f32.mrf.mxu0
      %v451 = vadd.f32 0.0, %v450
      %v452 = vpop.f32.mrf.mxu0
      %v453 = vadd.f32 0.0, %v452
      %454 = vmatmul.bf16.gmra.mxu0 %v377
      %v455 = vpop.f32.mrf.mxu0
      %v456 = vadd.f32 0.0, %v455
      %v457 = vpop.f32.mrf.mxu0
      %v458 = vadd.f32 0.0, %v457
      %459 = vmatmul.bf16.gmra.mxu0 %v380
      %v460 = vpop.f32.mrf.mxu0
      %v461 = vadd.f32 0.0, %v460
      %v462 = vpop.f32.mrf.mxu0
      %v463 = vadd.f32 0.0, %v462
      %464 = vmatmul.bf16.gmra.mxu0 %v383
      %v465 = vpop.f32.mrf.mxu0
      %v466 = vadd.f32 0.0, %v465
      %v467 = vpop.f32.mrf.mxu0
      %v468 = vadd.f32 0.0, %v467
      %469 = vmatmul.bf16.gmra.mxu0 %v386
      %v470 = vpop.f32.mrf.mxu0
      %v471 = vadd.f32 0.0, %v470
      %v472 = vpop.f32.mrf.mxu0
      %v473 = vadd.f32 0.0, %v472
      %474 = vmatmul.bf16.gmra.mxu0 %v389
      %v475 = vpop.f32.mrf.mxu0
      %v476 = vadd.f32 0.0, %v475
      %v477 = vpop.f32.mrf.mxu0
      %v478 = vadd.f32 0.0, %v477
      %479 = vmatmul.bf16.gmra.mxu0 %v392
      %v480 = vpop.f32.mrf.mxu0
      %v481 = vadd.f32 0.0, %v480
      %v482 = vpop.f32.mrf.mxu0
      %v483 = vadd.f32 0.0, %v482
      %484 = vmatmul.bf16.gmra.mxu0 %v395
      %v485 = vpop.f32.mrf.mxu0
      %v486 = vadd.f32 0.0, %v485
      %v487 = vpop.f32.mrf.mxu0
      %v488 = vadd.f32 0.0, %v487
      %489 = vdwg.mxu0
      %v490 = vpack.c.bf16 %v411, %v411
      %v491 = vpack.c.bf16 %v413, %v413
      %v492 = vpack.c.bf16 %v416, %v416
      %v493 = vpack.c.bf16 %v418, %v418
      %v494 = vpack.c.bf16 %v421, %v421
      %v495 = vpack.c.bf16 %v423, %v423
      %v496 = vpack.c.bf16 %v426, %v426
      %v497 = vpack.c.bf16 %v428, %v428
      %v498 = vpack.c.bf16 %v431, %v431
      %v499 = vpack.c.bf16 %v433, %v433
      %v500 = vpack.c.bf16 %v436, %v436
      %v501 = vpack.c.bf16 %v438, %v438
      %v502 = vpack.c.bf16 %v441, %v441
      %v503 = vpack.c.bf16 %v443, %v443
      %v504 = vpack.c.bf16 %v446, %v446
      %v505 = vpack.c.bf16 %v448, %v448
      %v506 = vpack.c.bf16 %v451, %v451
      %v507 = vpack.c.bf16 %v453, %v453
      %v508 = vpack.c.bf16 %v456, %v456
      %v509 = vpack.c.bf16 %v458, %v458
      %v510 = vpack.c.bf16 %v461, %v461
      %v511 = vpack.c.bf16 %v463, %v463
      %v512 = vpack.c.bf16 %v466, %v466
      %v513 = vpack.c.bf16 %v468, %v468
      %v514 = vpack.c.bf16 %v471, %v471
      %v515 = vpack.c.bf16 %v473, %v473
      %v516 = vpack.c.bf16 %v476, %v476
      %v517 = vpack.c.bf16 %v478, %v478
      %v518 = vpack.c.bf16 %v481, %v481
      %v519 = vpack.c.bf16 %v483, %v483
      %v520 = vpack.c.bf16 %v486, %v486
      %v521 = vpack.c.bf16 %v488, %v488
      %vm522 = vcmask 27648
      %523 = vst.msk [vmem:[%s208] sm:$0xf] %vm522, %v490
      %524 = vst.msk [vmem:[%s208 + $0x4] sm:$0xf] %vm522, %v491
      %525 = vst.msk [vmem:[%s208 + $0x8] sm:$0xf] %vm522, %v492
      %526 = vst.msk [vmem:[%s208 + $0xc] sm:$0xf] %vm522, %v493
      %527 = vst.msk [vmem:[%s208 + $0x10] sm:$0xf] %vm522, %v494
      %528 = vst.msk [vmem:[%s208 + $0x14] sm:$0xf] %vm522, %v495
      %529 = vst.msk [vmem:[%s208 + $0x18] sm:$0xf] %vm522, %v496
      %530 = vst.msk [vmem:[%s208 + $0x1c] sm:$0xf] %vm522, %v497
      %531 = vst.msk [vmem:[%s208 + $0x20] sm:$0xf] %vm522, %v498
      %532 = vst.msk [vmem:[%s208 + $0x24] sm:$0xf] %vm522, %v499
      %533 = vst.msk [vmem:[%s208 + $0x28] sm:$0xf] %vm522, %v500
      %534 = vst.msk [vmem:[%s208 + $0x2c] sm:$0xf] %vm522, %v501
      %535 = vst.msk [vmem:[%s208 + $0x30] sm:$0xf] %vm522, %v502
      %536 = vst.msk [vmem:[%s208 + $0x34] sm:$0xf] %vm522, %v503
      %537 = vst.msk [vmem:[%s208 + $0x38] sm:$0xf] %vm522, %v504
      %538 = vst.msk [vmem:[%s208 + $0x3c] sm:$0xf] %vm522, %v505
      %539 = vst.msk [vmem:[%s208 + $0x40] sm:$0xf] %vm522, %v506
      %540 = vst.msk [vmem:[%s208 + $0x44] sm:$0xf] %vm522, %v507
      %541 = vst.msk [vmem:[%s208 + $0x48] sm:$0xf] %vm522, %v508
      %542 = vst.msk [vmem:[%s208 + $0x4c] sm:$0xf] %vm522, %v509
      %543 = vst.msk [vmem:[%s208 + $0x50] sm:$0xf] %vm522, %v510
      %544 = vst.msk [vmem:[%s208 + $0x54] sm:$0xf] %vm522, %v511
      %545 = vst.msk [vmem:[%s208 + $0x58] sm:$0xf] %vm522, %v512
      %546 = vst.msk [vmem:[%s208 + $0x5c] sm:$0xf] %vm522, %v513
      %547 = vst.msk [vmem:[%s208 + $0x60] sm:$0xf] %vm522, %v514
      %548 = vst.msk [vmem:[%s208 + $0x64] sm:$0xf] %vm522, %v515
      %549 = vst.msk [vmem:[%s208 + $0x68] sm:$0xf] %vm522, %v516
      %550 = vst.msk [vmem:[%s208 + $0x6c] sm:$0xf] %vm522, %v517
      %551 = vst.msk [vmem:[%s208 + $0x70] sm:$0xf] %vm522, %v518
      %552 = vst.msk [vmem:[%s208 + $0x74] sm:$0xf] %vm522, %v519
      %553 = vst.msk [vmem:[%s208 + $0x78] sm:$0xf] %vm522, %v520
      %554 = vst.msk [vmem:[%s208 + $0x7c] sm:$0xf] %vm522, %v521
      %vm555 = vcmask 31744
      %v556 = vsel %vm555, %v411, 0.0
      %v557 = vsel %vm555, %v413, 0.0
      %v558 = vadd.f32 %v556, %v557
      %v559 = vsel %vm555, %v416, 0.0
      %v560 = vadd.f32 %v558, %v559
      %v561 = vsel %vm555, %v418, 0.0
      %v562 = vadd.f32 %v560, %v561
      %v563 = vsel %vm555, %v421, 0.0
      %v564 = vadd.f32 %v562, %v563
      %v565 = vsel %vm555, %v423, 0.0
      %v566 = vadd.f32 %v564, %v565
      %v567 = vsel %vm555, %v426, 0.0
      %v568 = vadd.f32 %v566, %v567
      %v569 = vsel %vm555, %v428, 0.0
      %v570 = vadd.f32 %v568, %v569
      %v571 = vsel %vm555, %v431, 0.0
      %v572 = vadd.f32 %v570, %v571
      %v573 = vsel %vm555, %v433, 0.0
      %v574 = vadd.f32 %v572, %v573
      %v575 = vsel %vm555, %v436, 0.0
      %v576 = vadd.f32 %v574, %v575
      %v577 = vsel %vm555, %v438, 0.0
      %v578 = vadd.f32 %v576, %v577
      %v579 = vsel %vm555, %v441, 0.0
      %v580 = vadd.f32 %v578, %v579
      %v581 = vsel %vm555, %v443, 0.0
      %v582 = vadd.f32 %v580, %v581
      %v583 = vsel %vm555, %v446, 0.0
      %v584 = vadd.f32 %v582, %v583
      %v585 = vsel %vm555, %v448, 0.0
      %v586 = vadd.f32 %v584, %v585
      %v587 = vsel %vm555, %v451, 0.0
      %v588 = vadd.f32 %v586, %v587
      %v589 = vsel %vm555, %v453, 0.0
      %v590 = vadd.f32 %v588, %v589
      %v591 = vsel %vm555, %v456, 0.0
      %v592 = vadd.f32 %v590, %v591
      %v593 = vsel %vm555, %v458, 0.0
      %v594 = vadd.f32 %v592, %v593
      %v595 = vsel %vm555, %v461, 0.0
      %v596 = vadd.f32 %v594, %v595
      %v597 = vsel %vm555, %v463, 0.0
      %v598 = vadd.f32 %v596, %v597
      %v599 = vsel %vm555, %v466, 0.0
      %v600 = vadd.f32 %v598, %v599
      %v601 = vsel %vm555, %v468, 0.0
      %v602 = vadd.f32 %v600, %v601
      %v603 = vsel %vm555, %v471, 0.0
      %v604 = vadd.f32 %v602, %v603
      %v605 = vsel %vm555, %v473, 0.0
      %v606 = vadd.f32 %v604, %v605
      %v607 = vsel %vm555, %v476, 0.0
      %v608 = vadd.f32 %v606, %v607
      %v609 = vsel %vm555, %v478, 0.0
      %v610 = vadd.f32 %v608, %v609
      %v611 = vsel %vm555, %v481, 0.0
      %v612 = vadd.f32 %v610, %v611
      %v613 = vsel %vm555, %v483, 0.0
      %v614 = vadd.f32 %v612, %v613
      %v615 = vsel %vm555, %v486, 0.0
      %v616 = vadd.f32 %v614, %v615
      %v617 = vsel %vm555, %v488, 0.0
      %v618 = vadd.f32 %v616, %v617
      %v619 = vrot.slane %v618, 4
      %v620 = vadd.f32 %v618, %v619
      %v621 = vrot.slane %v620, 2
      %v622 = vadd.f32 %v620, %v621
      %v623 = vrot.slane %v622, 1
      %v624 = vadd.f32 %v622, %v623
      %v625 = vmul.f32 %v624, 0.00390625
      %v626 = vsub.f32 %v411, %v625
      %v627 = vsub.f32 %v413, %v625
      %v628 = vsub.f32 %v416, %v625
      %v629 = vsub.f32 %v418, %v625
      %v630 = vsub.f32 %v421, %v625
      %v631 = vsub.f32 %v423, %v625
      %v632 = vsub.f32 %v426, %v625
      %v633 = vsub.f32 %v428, %v625
      %v634 = vsub.f32 %v431, %v625
      %v635 = vsub.f32 %v433, %v625
      %v636 = vsub.f32 %v436, %v625
      %v637 = vsub.f32 %v438, %v625
      %v638 = vsub.f32 %v441, %v625
      %v639 = vsub.f32 %v443, %v625
      %v640 = vsub.f32 %v446, %v625
      %v641 = vsub.f32 %v448, %v625
      %v642 = vsub.f32 %v451, %v625
      %v643 = vsub.f32 %v453, %v625
      %v644 = vsub.f32 %v456, %v625
      %v645 = vsub.f32 %v458, %v625
      %v646 = vsub.f32 %v461, %v625
      %v647 = vsub.f32 %v463, %v625
      %v648 = vsub.f32 %v466, %v625
      %v649 = vsub.f32 %v468, %v625
      %v650 = vsub.f32 %v471, %v625
      %v651 = vsub.f32 %v473, %v625
      %v652 = vsub.f32 %v476, %v625
      %v653 = vsub.f32 %v478, %v625
      %v654 = vsub.f32 %v481, %v625
      %v655 = vsub.f32 %v483, %v625
      %v656 = vsub.f32 %v486, %v625
      %v657 = vsub.f32 %v488, %v625
      %v658 = vmul.f32 %v626, %v626
      %v659 = vmul.f32 %v627, %v627
      %v660 = vmul.f32 %v628, %v628
      %v661 = vmul.f32 %v629, %v629
      %v662 = vmul.f32 %v630, %v630
      %v663 = vmul.f32 %v631, %v631
      %v664 = vmul.f32 %v632, %v632
      %v665 = vmul.f32 %v633, %v633
      %v666 = vmul.f32 %v634, %v634
      %v667 = vmul.f32 %v635, %v635
      %v668 = vmul.f32 %v636, %v636
      %v669 = vmul.f32 %v637, %v637
      %v670 = vmul.f32 %v638, %v638
      %v671 = vmul.f32 %v639, %v639
      %v672 = vmul.f32 %v640, %v640
      %v673 = vmul.f32 %v641, %v641
      %v674 = vmul.f32 %v642, %v642
      %v675 = vmul.f32 %v643, %v643
      %v676 = vmul.f32 %v644, %v644
      %v677 = vmul.f32 %v645, %v645
      %v678 = vmul.f32 %v646, %v646
      %v679 = vmul.f32 %v647, %v647
      %v680 = vmul.f32 %v648, %v648
      %v681 = vmul.f32 %v649, %v649
      %v682 = vmul.f32 %v650, %v650
      %v683 = vmul.f32 %v651, %v651
      %v684 = vmul.f32 %v652, %v652
      %v685 = vmul.f32 %v653, %v653
      %v686 = vmul.f32 %v654, %v654
      %v687 = vmul.f32 %v655, %v655
      %v688 = vmul.f32 %v656, %v656
      %v689 = vmul.f32 %v657, %v657
      %v690 = vsel %vm555, %v658, 0.0
      %v691 = vsel %vm555, %v659, 0.0
      %v692 = vadd.f32 %v690, %v691
      %v693 = vsel %vm555, %v660, 0.0
      %v694 = vadd.f32 %v692, %v693
      %v695 = vsel %vm555, %v661, 0.0
      %v696 = vadd.f32 %v694, %v695
      %v697 = vsel %vm555, %v662, 0.0
      %v698 = vadd.f32 %v696, %v697
      %v699 = vsel %vm555, %v663, 0.0
      %v700 = vadd.f32 %v698, %v699
      %v701 = vsel %vm555, %v664, 0.0
      %v702 = vadd.f32 %v700, %v701
      %v703 = vsel %vm555, %v665, 0.0
      %v704 = vadd.f32 %v702, %v703
      %v705 = vsel %vm555, %v666, 0.0
      %v706 = vadd.f32 %v704, %v705
      %v707 = vsel %vm555, %v667, 0.0
      %v708 = vadd.f32 %v706, %v707
      %v709 = vsel %vm555, %v668, 0.0
      %v710 = vadd.f32 %v708, %v709
      %v711 = vsel %vm555, %v669, 0.0
      %v712 = vadd.f32 %v710, %v711
      %v713 = vsel %vm555, %v670, 0.0
      %v714 = vadd.f32 %v712, %v713
      %v715 = vsel %vm555, %v671, 0.0
      %v716 = vadd.f32 %v714, %v715
      %v717 = vsel %vm555, %v672, 0.0
      %v718 = vadd.f32 %v716, %v717
      %v719 = vsel %vm555, %v673, 0.0
      %v720 = vadd.f32 %v718, %v719
      %v721 = vsel %vm555, %v674, 0.0
      %v722 = vadd.f32 %v720, %v721
      %v723 = vsel %vm555, %v675, 0.0
      %v724 = vadd.f32 %v722, %v723
      %v725 = vsel %vm555, %v676, 0.0
      %v726 = vadd.f32 %v724, %v725
      %v727 = vsel %vm555, %v677, 0.0
      %v728 = vadd.f32 %v726, %v727
      %v729 = vsel %vm555, %v678, 0.0
      %v730 = vadd.f32 %v728, %v729
      %v731 = vsel %vm555, %v679, 0.0
      %v732 = vadd.f32 %v730, %v731
      %v733 = vsel %vm555, %v680, 0.0
      %v734 = vadd.f32 %v732, %v733
      %v735 = vsel %vm555, %v681, 0.0
      %v736 = vadd.f32 %v734, %v735
      %v737 = vsel %vm555, %v682, 0.0
      %v738 = vadd.f32 %v736, %v737
      %v739 = vsel %vm555, %v683, 0.0
      %v740 = vadd.f32 %v738, %v739
      %v741 = vsel %vm555, %v684, 0.0
      %v742 = vadd.f32 %v740, %v741
      %v743 = vsel %vm555, %v685, 0.0
      %v744 = vadd.f32 %v742, %v743
      %v745 = vsel %vm555, %v686, 0.0
      %v746 = vadd.f32 %v744, %v745
      %v747 = vsel %vm555, %v687, 0.0
      %v748 = vadd.f32 %v746, %v747
      %v749 = vsel %vm555, %v688, 0.0
      %v750 = vadd.f32 %v748, %v749
      %v751 = vsel %vm555, %v689, 0.0
      %v752 = vadd.f32 %v750, %v751
      %v753 = vrot.slane %v752, 4
      %v754 = vadd.f32 %v752, %v753
      %v755 = vrot.slane %v754, 2
      %v756 = vadd.f32 %v754, %v755
      %v757 = vrot.slane %v756, 1
      %v758 = vadd.f32 %v756, %v757
      %vm759 = vcmask 24576
      %760 = vst.msk [vmem:[%s211] sm:$0x1] %vm759, %v624
      %761 = vst.msk [vmem:[%s214] sm:$0x1] %vm759, %v758
      %p762 = scmp.lt.s32.totalorder %s16, 1
      %s763 = scalar_select %p762, %s16, 1
      %s764 = smul.addr %s763, 32
      %s765 = smul.addr %s764, 4
      %s766 = scalar_lea.vmem %s2, %s765
      %p767 = scmp.lt.s32.totalorder %s16, 1
      %s768 = scalar_select %p767, %s16, 1
      %s769 = scalar_lea.vmem %s3, %s768
      %p770 = scmp.lt.s32.totalorder %s16, 1
      %s771 = scalar_select %p770, %s16, 1
      %s772 = scalar_lea.vmem %s4, %s771
      // Predicated region
      $region29: #{res_block_encoder_forward.3} parent=27 // pred_check
        %p773 = pneg %p81
      $region30: #{res_block_encoder_forward.3} parent=27 // pred_check_branch
        %775 = sbr.rel (%p773) target = $region32
      $region31: #{res_block_encoder_forward.3} parent=27 // pred_region
        _
      $region32: #{res_block_encoder_forward.3} parent=27 // pred_fallthru
        _
      // Predicated region
      $region33: #{res_block_encoder_forward.3} parent=27 // pred_check
        %p776 = pneg %p107
      $region34: #{res_block_encoder_forward.3} parent=27 // pred_check_branch
        %778 = sbr.rel (%p776) target = $region36
      $region35: #{res_block_encoder_forward.3} parent=27 // pred_region
        _
      $region36: #{res_block_encoder_forward.3} parent=27 // pred_fallthru
        _
      // Predicated region
      $region37: #{res_block_encoder_forward.3} parent=27 // pred_check
        %p779 = pneg %p133
      $region38: #{res_block_encoder_forward.3} parent=27 // pred_check_branch
        %781 = sbr.rel (%p779) target = $region40
      $region39: #{res_block_encoder_forward.3} parent=27 // pred_region
        _
      $region40: #{res_block_encoder_forward.3} parent=27 // pred_fallthru
        _
    $region28: #{res_block_encoder_forward.3} parent=5 // pred_fallthru
      _
    %p782 = scmp.le.s32.totalorder 2, %s11
    // Predicated region
    $region41: #{res_block_encoder_forward.3} parent=5 // pred_check
      %p783 = pneg %p782
    $region42: #{res_block_encoder_forward.3} parent=5 // pred_check_branch
      %785 = sbr.rel (%p783) target = $region44
    $region43: #{res_block_encoder_forward.3} parent=5 // pred_region
      %s786 = ssub.s32 %s11, 2
      // Predicated region
      $region45: #{res_block_encoder_forward.3} parent=43 // pred_check
        %p787 = pneg %p87
      $region46: #{res_block_encoder_forward.3} parent=43 // pred_check_branch
        %789 = sbr.rel (%p787) target = $region48
      $region47: #{res_block_encoder_forward.3} parent=43 // pred_region
        %p790 = scmp.lt.s32.totalorder %s17, 1
        %s791 = scalar_select %p790, %s17, 1
        %s792 = smul.addr %s791, 32
        %s793 = smul.addr %s792, 4
        %s794 = scalar_lea.vmem %s2, %s793
      $region48: #{res_block_encoder_forward.3} parent=43 // pred_fallthru
        _
      // Predicated region
      $region49: #{res_block_encoder_forward.3} parent=43 // pred_check
        %p795 = pneg %p113
      $region50: #{res_block_encoder_forward.3} parent=43 // pred_check_branch
        %797 = sbr.rel (%p795) target = $region52
      $region51: #{res_block_encoder_forward.3} parent=43 // pred_region
        %p798 = scmp.lt.s32.totalorder %s17, 1
        %s799 = scalar_select %p798, %s17, 1
        %s800 = scalar_lea.vmem %s3, %s799
      $region52: #{res_block_encoder_forward.3} parent=43 // pred_fallthru
        _
      // Predicated region
      $region53: #{res_block_encoder_forward.3} parent=43 // pred_check
        %p801 = pneg %p139
      $region54: #{res_block_encoder_forward.3} parent=43 // pred_check_branch
        %803 = sbr.rel (%p801) target = $region56
      $region55: #{res_block_encoder_forward.3} parent=43 // pred_region
        %p804 = scmp.lt.s32.totalorder %s17, 1
        %s805 = scalar_select %p804, %s17, 1
        %s806 = scalar_lea.vmem %s4, %s805
      $region56: #{res_block_encoder_forward.3} parent=43 // pred_fallthru
        _
    $region44: #{res_block_encoder_forward.3} parent=5 // pred_fallthru
      _
  $region6: #{res_block_encoder_forward.3} parent=0 // loop_footer
    %s15 = sadd.s32 1, %s11
  $region7: #{res_block_encoder_forward.3} parent=0 // loop_footer_branch
    %10 = sbr.rel target = $region3
  $region8: #{res_block_encoder_forward.3} parent=0 // loop_exit
    _

// kernel: res_block_encoder_forward.4
$region0: #{res_block_encoder_forward.4}
  #allocation0 [shape = 'u32[]', space=smem, size = 0x4, offset = 0x4, fixed_abs, tag = 'smem constant byte address 0x4 - core index']
  #allocation1 [shape = 'u32[72,128]{1,0:T(1,128)}', space=vmem, size = 0x9000, scoped, tag = 'internal scratch']
  %s0 = inlined_call_operand.vmem [shape: bf16[2,9,9,16], index: 0, kind: input, shape index: {}]
  %s1 = inlined_call_operand.vmem [shape: bf16[4,16,8], index: 1, kind: input, shape index: {}]
  %s2 = inlined_call_operand.vmem [shape: bf16[2,8,8,8], index: 2, kind: output, shape index: {0}]
  %s3 = inlined_call_operand.vmem [shape: f32[2,1,8], index: 3, kind: output, shape index: {1}]
  %s4 = inlined_call_operand.vmem [shape: f32[2,1,8], index: 4, kind: output, shape index: {2}]
  %5 = xla_tuple %s2, %s3, %s4
  %s6 = sld [smem:[#allocation0]]
  $region57: #{res_block_encoder_forward.4} parent=0
    _
  %s8 = ssub.s32 1, %s6
  %s9 = scalar_select 0, %s8, %s6
  loop: start=0, step=1, limit=4
  $region2: #{res_block_encoder_forward.4} parent=0 // loop_pre_header
    _
  $region3: #{res_block_encoder_forward.4} parent=0 // loop_header
    %s11 = sphi 0, %s15
    %p12 = scmp.ge.s32.totalorder %s11, 4
    %s21 = sphi 0, %s23
    %s24 = sphi 0, %s21
    %s25 = sphi 0, %s24
    %s41 = sphi 0, %s25
    %s45 = sphi 0, %s45
    %s47 = sphi 0, %s45
    %s48 = sphi 0, %s47
    %s62 = sphi 0, %s48
    %s68 = sphi 0, %s70
    %s71 = sphi 0, %s68
    %s72 = sphi 0, %s71
    %s88 = sphi 0, %s72
    %s94 = sphi 0, %s96
    %s97 = sphi 0, %s94
    %s98 = sphi 0, %s97
    %s114 = sphi 0, %s98
    %s120 = sphi 0, %s122
    %s123 = sphi 0, %s120
    %s124 = sphi 0, %s123
    %s140 = sphi 0, %s124
  $region4: #{res_block_encoder_forward.4} parent=0 // loop_header_branch
    %14 = sbr.rel (%p12) target = $region8
  $region5: #{res_block_encoder_forward.4} parent=0 // loop_body
    %s16 = ssub.s32 %s11, 1
    %s17 = ssub.s32 %s11, 2
    %s18 = sadd.s32 %s11, 1
    %s19 = ssub.s32 %s11, %s18
    %p20 = scmp.eq.s32.totalorder %s19, 0
    %s22 = sadd.s32 %s21, 1
    %s23 = scalar_select %p20, %s21, %s22
    %p26 = pneg %p20
    %p27 = scmp.eq.s32.totalorder %s11, 1
    %p28 = por %p26, %p27
    %p29 = scmp.ne.s32.totalorder %s21, %s24
    %p30 = scmp.eq.s32.totalorder %s11, 0
    %p31 = por %p29, %p30
    %p32 = scmp.ne.s32.totalorder %s21, %s24
    %p33 = scmp.eq.s32.totalorder %s16, 1
    %p34 = por %p32, %p33
    %p35 = scmp.ne.s32.totalorder %s24, %s25
    %p36 = scmp.eq.s32.totalorder %s16, 0
    %p37 = por %p35, %p36
    %p38 = scmp.ne.s32.totalorder %s24, %s25
    %p39 = scmp.eq.s32.totalorder %s17, 1
    %p40 = por %p38, %p39
    %p42 = scmp.ne.s32.totalorder %s25, %s41
    %p43 = scmp.eq.s32.totalorder %s17, 0
    %p44 = por %p42, %p43
    %s46 = sadd.s32 %s45, 1
    %p49 = scmp.eq.s32.totalorder %s11, 1
    %p50 = scmp.ne.s32.totalorder %s45, %s47
    %p51 = scmp.eq.s32.totalorder %s11, 0
    %p52 = por %p50, %p51
    %p53 = scmp.ne.s32.totalorder %s45, %s47
    %p54 = scmp.eq.s32.totalorder %s16, 1
    %p55 = por %p53, %p54
    %p56 = scmp.ne.s32.totalorder %s47, %s48
    %p57 = scmp.eq.s32.totalorder %s16, 0
    %p58 = por %p56, %p57
    %p59 = scmp.ne.s32.totalorder %s47, %s48
    %p60 = scmp.eq.s32.totalorder %s17, 1
    %p61 = por %p59, %p60
    %p63 = scmp.ne.s32.totalorder %s48, %s62
    %p64 = scmp.eq.s32.totalorder %s17, 0
    %p65 = por %p63, %p64
    %s66 = ssub.s32 %s11, %s18
    %p67 = scmp.eq.s32.totalorder %s66, 0
    %s69 = sadd.s32 %s68, 1
    %s70 = scalar_select %p67, %s68, %s69
    %p73 = pneg %p67
    %p74 = scmp.eq.s32.totalorder %s11, 1
    %p75 = por %p73, %p74
    %p76 = scmp.ne.s32.totalorder %s68, %s71
    %p77 = scmp.eq.s32.totalorder %s11, 0
    %p78 = por %p76, %p77
    %p79 = scmp.ne.s32.totalorder %s68, %s71
    %p80 = scmp.eq.s32.totalorder %s16, 1
    %p81 = por %p79, %p80
    %p82 = scmp.ne.s32.totalorder %s71, %s72
    %p83 = scmp.eq.s32.totalorder %s16, 0
    %p84 = por %p82, %p83
    %p85 = scmp.ne.s32.totalorder %s71, %s72
    %p86 = scmp.eq.s32.totalorder %s17, 1
    %p87 = por %p85, %p86
    %p89 = scmp.ne.s32.totalorder %s72, %s88
    %p90 = scmp.eq.s32.totalorder %s17, 0
    %p91 = por %p89, %p90
    %s92 = ssub.s32 %s11, %s18
    %p93 = scmp.eq.s32.totalorder %s92, 0
    %s95 = sadd.s32 %s94, 1
    %s96 = scalar_select %p93, %s94, %s95
    %p99 = pneg %p93
    %p100 = scmp.eq.s32.totalorder %s11, 1
    %p101 = por %p99, %p100
    %p102 = scmp.ne.s32.totalorder %s94, %s97
    %p103 = scmp.eq.s32.totalorder %s11, 0
    %p104 = por %p102, %p103
    %p105 = scmp.ne.s32.totalorder %s94, %s97
    %p106 = scmp.eq.s32.totalorder %s16, 1
    %p107 = por %p105, %p106
    %p108 = scmp.ne.s32.totalorder %s97, %s98
    %p109 = scmp.eq.s32.totalorder %s16, 0
    %p110 = por %p108, %p109
    %p111 = scmp.ne.s32.totalorder %s97, %s98
    %p112 = scmp.eq.s32.totalorder %s17, 1
    %p113 = por %p111, %p112
    %p115 = scmp.ne.s32.totalorder %s98, %s114
    %p116 = scmp.eq.s32.totalorder %s17, 0
    %p117 = por %p115, %p116
    %s118 = ssub.s32 %s11, %s18
    %p119 = scmp.eq.s32.totalorder %s118, 0
    %s121 = sadd.s32 %s120, 1
    %s122 = scalar_select %p119, %s120, %s121
    %p125 = pneg %p119
    %p126 = scmp.eq.s32.totalorder %s11, 1
    %p127 = por %p125, %p126
    %p128 = scmp.ne.s32.totalorder %s120, %s123
    %p129 = scmp.eq.s32.totalorder %s11, 0
    %p130 = por %p128, %p129
    %p131 = scmp.ne.s32.totalorder %s120, %s123
    %p132 = scmp.eq.s32.totalorder %s16, 1
    %p133 = por %p131, %p132
    %p134 = scmp.ne.s32.totalorder %s123, %s124
    %p135 = scmp.eq.s32.totalorder %s16, 0
    %p136 = por %p134, %p135
    %p137 = scmp.ne.s32.totalorder %s123, %s124
    %p138 = scmp.eq.s32.totalorder %s17, 1
    %p139 = por %p137, %p138
    %p141 = scmp.ne.s32.totalorder %s124, %s140
    %p142 = scmp.eq.s32.totalorder %s17, 0
    %p143 = por %p141, %p142
    %p144 = scmp.le.s32.totalorder 1, %s11
    %p145 = scmp.lt.s32.totalorder %s11, 3
    %p146 = pnand %p144, %p145
    %p147 = pneg %p146
    // Predicated region
    $region9: #{res_block_encoder_forward.4} parent=5 // pred_check
      _
    $region10: #{res_block_encoder_forward.4} parent=5 // pred_check_branch
      %149 = sbr.rel (%p146) target = $region12
    $region11: #{res_block_encoder_forward.4} parent=5 // pred_region
      %s150 = ssub.s32 %s11, 1
      // Predicated region
      $region13: #{res_block_encoder_forward.4} parent=11 // pred_check
        %p151 = pneg %p58
      $region14: #{res_block_encoder_forward.4} parent=11 // pred_check_branch
        %153 = sbr.rel (%p151) target = $region16
      $region15: #{res_block_encoder_forward.4} parent=11 // pred_region
        _
      $region16: #{res_block_encoder_forward.4} parent=11 // pred_fallthru
        _
    $region12: #{res_block_encoder_forward.4} parent=5 // pred_fallthru
      _
    %p154 = scmp.lt.s32.totalorder %s11, 2
    // Predicated region
    $region17: #{res_block_encoder_forward.4} parent=5 // pred_check
      %p155 = pneg %p154
    $region18: #{res_block_encoder_forward.4} parent=5 // pred_check_branch
      %157 = sbr.rel (%p155) target = $region20
    $region19: #{res_block_encoder_forward.4} parent=5 // pred_region
      // Predicated region
      $region21: #{res_block_encoder_forward.4} parent=19 // pred_check
        %p158 = pneg %p31
      $region22: #{res_block_encoder_forward.4} parent=19 // pred_check_branch
        %160 = sbr.rel (%p158) target = $region24
      $region23: #{res_block_encoder_forward.4} parent=19 // pred_region
        %p161 = scmp.lt.s32.totalorder %s11, 1
        %s162 = scalar_select %p161, %s11, 1
        %s163 = smul.addr %s162, 18
        %s164 = smul.addr %s163, 4
        %s165 = scalar_lea.vmem %s0, %s164
      $region24: #{res_block_encoder_forward.4} parent=19 // pred_fallthru
        _
    $region20: #{res_block_encoder_forward.4} parent=5 // pred_fallthru
      _
    %p166 = scmp.le.s32.totalorder 1, %s11
    %p167 = scmp.lt.s32.totalorder %s11, 3
    %p168 = pnand %p166, %p167
    %p169 = pneg %p168
    // Predicated region
    $region25: #{res_block_encoder_forward.4} parent=5 // pred_check
      _
    $region26: #{res_block_encoder_forward.4} parent=5 // pred_check_branch
      %171 = sbr.rel (%p168) target = $region28
    $region27: #{res_block_encoder_forward.4} parent=5 // pred_region
      %s172 = ssub.s32 %s11, 1
      %p173 = scmp.lt.s32.totalorder %s16, 1
      %s174 = scalar_select %p173, %s16, 1
      %s175 = smul.addr %s174, 18
      %s176 = smul.addr %s175, 4
      %s177 = scalar_lea.vmem %s0, %s176
      %p178 = pneg %p37
      %p179 = pneg %p34
      %p180 = pneg %p58
      %p181 = pneg %p55
      %p182 = pneg %p84
      %p183 = pneg %p81
      %p184 = scmp.lt.s32.totalorder %s16, 1
      %s185 = scalar_select %p184, %s16, 1
      %s186 = smul.addr %s185, 8
      %s187 = smul.addr %s186, 4
      %s188 = scalar_lea.vmem %s2, %s187
      %p189 = pneg %p110
      %p190 = pneg %p107
      %p191 = scmp.lt.s32.totalorder %s16, 1
      %s192 = scalar_select %p191, %s16, 1
      %s193 = scalar_lea.vmem %s3, %s192
      %p194 = pneg %p136
      %p195 = pneg %p133
      %p196 = scmp.lt.s32.totalorder %s16, 1
      %s197 = scalar_select %p196, %s16, 1
      %s198 = scalar_lea.vmem %s4, %s197
      %p199 = scmp.lt.s32.totalorder %s16, 1
      %s200 = scalar_select %p199, %s16, 1
      %s201 = smul.addr %s200, 18
      %s202 = smul.addr %s201, 4
      %s203 = scalar_lea.vmem %s0, %s202
      %p204 = scmp.lt.s32.totalorder %s16, 1
      %s205 = scalar_select %p204, %s16, 1
      %s206 = smul.addr %s205, 8
      %s207 = smul.addr %s206, 4
      %s208 = scalar_lea.vmem %s2, %s207
      %p209 = scmp.lt.s32.totalorder %s16, 1
      %s210 = scalar_select %p209, %s16, 1
      %s211 = scalar_lea.vmem %s3, %s210
      %p212 = scmp.lt.s32.totalorder %s16, 1
      %s213 = scalar_select %p212, %s16, 1
      %s214 = scalar_lea.vmem %s4, %s213
      %v216 = vld [vmem:[%s203] sm:$0xf]
      %v217 = vld [vmem:[%s203 + $0x4] sm:$0x1]
      %v218 = vld [vmem:[%s203 + $0x8] sm:$0xf]
      %v219 = vld [vmem:[%s203 + $0xc] sm:$0x1]
      %v220 = vld [vmem:[%s203 + $0x10] sm:$0xf]
      %v221 = vld [vmem:[%s203 + $0x14] sm:$0x1]
      %v222 = vld [vmem:[%s203 + $0x18] sm:$0xf]
      %v223 = vld [vmem:[%s203 + $0x1c] sm:$0x1]
      %v224 = vld [vmem:[%s203 + $0x20] sm:$0xf]
      %v225 = vld [vmem:[%s203 + $0x24] sm:$0x1]
      %v226 = vld [vmem:[%s203 + $0x28] sm:$0xf]
      %v227 = vld [vmem:[%s203 + $0x2c] sm:$0x1]
      %v228 = vld [vmem:[%s203 + $0x30] sm:$0xf]
      %v229 = vld [vmem:[%s203 + $0x34] sm:$0x1]
      %v230 = vld [vmem:[%s203 + $0x38] sm:$0xf]
      %v231 = vld [vmem:[%s203 + $0x3c] sm:$0x1]
      %v232 = vld [vmem:[%s203 + $0x40] sm:$0xf]
      %v233 = vld [vmem:[%s203 + $0x44] sm:$0x1]
      %v234 = vld [vmem:[%s1] sm:$0xf]
      %v235 = vld [vmem:[%s1 + $0x4] sm:$0xf]
      %vm236 = vsmask.f32 3328
      %vm237 = vsmask.f32 7440
      %vm238 = vmor %vm236, %vm237
      %v240 = vshrl.u32 %v216, 16
      %v242 = vrot.slane %v240, 4
      %v243 = vshll.u32 %v216, 16
      %v245 = vrot.slane %v243, 5
      %v246 = vor.u32 %v242, %v245
      %v247 = vrot.slane %v246, 4
      %v249 = vshll.u32 %v217, 16
      %v251 = vrot.slane %v249, 5
      %v252 = vsel %vm238, %v247, %v251
      %v254 = vshrl.u32 %v218, 16
      %v256 = vrot.slane %v254, 4
      %v257 = vshll.u32 %v218, 16
      %v259 = vrot.slane %v257, 5
      %v260 = vor.u32 %v256, %v259
      %v261 = vrot.slane %v260, 4
      %v263 = vshll.u32 %v219, 16
      %v265 = vrot.slane %v263, 5
      %v266 = vsel %vm238, %v261, %v265
      %v268 = vshrl.u32 %v220, 16
      %v270 = vrot.slane %v268, 4
      %v271 = vshll.u32 %v220, 16
      %v273 = vrot.slane %v271, 5
      %v274 = vor.u32 %v270, %v273
      %v275 = vrot.slane %v274, 4
      %v277 = vshll.u32 %v221, 16
      %v279 = vrot.slane %v277, 5
      %v280 = vsel %vm238, %v275, %v279
      %v282 = vshrl.u32 %v222, 16
      %v284 = vrot.slane %v282, 4
      %v285 = vshll.u32 %v222, 16
      %v287 = vrot.slane %v285, 5
      %v288 = vor.u32 %v284, %v287
      %v289 = vrot.slane %v288, 4
      %v291 = vshll.u32 %v223, 16
      %v293 = vrot.slane %v291, 5
      %v294 = vsel %vm238, %v289, %v293
      %v296 = vshrl.u32 %v224, 16
      %v298 = vrot.slane %v296, 4
      %v299 = vshll.u32 %v224, 16
      %v301 = vrot.slane %v299, 5
      %v302 = vor.u32 %v298, %v301
      %v303 = vrot.slane %v302, 4
      %v305 = vshll.u32 %v225, 16
      %v307 = vrot.slane %v305, 5
      %v308 = vsel %vm238, %v303, %v307
      %v310 = vshrl.u32 %v226, 16
      %v312 = vrot.slane %v310, 4
      %v313 = vshll.u32 %v226, 16
      %v315 = vrot.slane %v313, 5
      %v316 = vor.u32 %v312, %v315
      %v317 = vrot.slane %v316, 4
      %v319 = vshll.u32 %v227, 16
      %v321 = vrot.slane %v319, 5
      %v322 = vsel %vm238, %v317, %v321
      %v324 = vshrl.u32 %v228, 16
      %v326 = vrot.slane %v324, 4
      %v327 = vshll.u32 %v228, 16
      %v329 = vrot.slane %v327, 5
      %v330 = vor.u32 %v326, %v329
      %v331 = vrot.slane %v330, 4
      %v333 = vshll.u32 %v229, 16
      %v335 = vrot.slane %v333, 5
      %v336 = vsel %vm238, %v331, %v335
      %v338 = vshrl.u32 %v230, 16
      %v340 = vrot.slane %v338, 4
      %v341 = vshll.u32 %v230, 16
      %v343 = vrot.slane %v341, 5
      %v344 = vor.u32 %v340, %v343
      %v345 = vrot.slane %v344, 4
      %v347 = vshll.u32 %v231, 16
      %v349 = vrot.slane %v347, 5
      %v350 = vsel %vm238, %v345, %v349
      %s351 = scalar_lea.vmem %s1, 8
      %v352 = vld [vmem:[%s351] sm:$0xf]
      %v353 = vld [vmem:[%s351 + $0x4] sm:$0xf]
      %v354 = vunpack.c.l.b16 %v252
      %v355 = vunpack.c.l.b16 %v266
      %v356 = vunpack.c.l.b16 %v280
      %v357 = vunpack.c.l.b16 %v294
      %v358 = vunpack.c.l.b16 %v308
      %v359 = vunpack.c.l.b16 %v322
      %v360 = vunpack.c.l.b16 %v336
      %v361 = vunpack.c.l.b16 %v350
      %v362 = vpack.c.b16 %v355, %v354
      %v363 = vpack.c.b16 %v357, %v356
      %v364 = vpack.c.b16 %v359, %v358
      %v365 = vpack.c.b16 %v361, %v360
      %v368 = vunpack.c.l.b16 %v352
      %v369 = vunpack.c.l.b16 %v353
      %v370 = vpack.c.b16 %v369, %v368
      %vm372 = vcmask 130048
      %v374 = vsel %vm372, %v362, 0
      %v377 = vsel %vm372, %v363, 0
      %v380 = vsel %vm372, %v364, 0
      %v383 = vsel %vm372, %v365, 0
      %385 = vmatpush.bf16.msra.mxu0 0
      %386 = vmatpush.bf16.msra.mxu0 0
      %387 = vmatpush.bf16.msra.mxu0 0
      %388 = vmatpush.bf16.msra.mxu0 0
      %389 = vmatpush.bf16.msra.mxu0 0
      %390 = vmatpush.bf16.msra.mxu0 0
      %391 = vmatpush.bf16.msra.mxu0 0
      %392 = vmatpush.bf16.msra.mxu0 %v370
      %393 = vmatmul.bf16.gmra.mxu0 %v374
      %v394 = vpop.f32.mrf.mxu0
      %v395 = vadd.f32 0.0, %v394
      %v396 = vpop.f32.mrf.mxu0
      %v397 = vadd.f32 0.0, %v396
      %398 = vmatmul.bf16.gmra.mxu0 %v377
      %v399 = vpop.f32.mrf.mxu0
      %v400 = vadd.f32 0.0, %v399
      %v401 = vpop.f32.mrf.mxu0
      %v402 = vadd.f32 0.0, %v401
      %403 = vmatmul.bf16.gmra.mxu0 %v380
      %v404 = vpop.f32.mrf.mxu0
      %v405 = vadd.f32 0.0, %v404
      %v406 = vpop.f32.mrf.mxu0
      %v407 = vadd.f32 0.0, %v406
      %408 = vmatmul.bf16.gmra.mxu0 %v383
      %v409 = vpop.f32.mrf.mxu0
      %v410 = vadd.f32 0.0, %v409
      %v411 = vpop.f32.mrf.mxu0
      %v412 = vadd.f32 0.0, %v411
      %413 = vdwg.mxu0
      %v422 = vunpack.c.l.b16 %v216
      %v423 = vunpack.c.l.b16 %v218
      %v424 = vunpack.c.l.b16 %v220
      %v425 = vunpack.c.l.b16 %v222
      %v426 = vunpack.c.l.b16 %v224
      %v427 = vunpack.c.l.b16 %v226
      %v428 = vunpack.c.l.b16 %v228
      %v429 = vunpack.c.l.b16 %v230
      %v430 = vpack.c.b16 %v423, %v422
      %v431 = vpack.c.b16 %v425, %v424
      %v432 = vpack.c.b16 %v427, %v426
      %v433 = vpack.c.b16 %v429, %v428
      %v436 = vunpack.c.l.b16 %v234
      %v437 = vunpack.c.l.b16 %v235
      %v438 = vpack.c.b16 %v437, %v436
      %v441 = vsel %vm372, %v430, 0
      %v444 = vsel %vm372, %v431, 0
      %v447 = vsel %vm372, %v432, 0
      %v450 = vsel %vm372, %v433, 0
      %452 = vmatpush.bf16.msra.mxu0 0
      %453 = vmatpush.bf16.msra.mxu0 0
      %454 = vmatpush.bf16.msra.mxu0 0
      %455 = vmatpush.bf16.msra.mxu0 0
      %456 = vmatpush.bf16.msra.mxu0 0
      %457 = vmatpush.bf16.msra.mxu0 0
      %458 = vmatpush.bf16.msra.mxu0 0
      %459 = vmatpush.bf16.msra.mxu0 %v438
      %460 = vmatmul.bf16.gmra.mxu0 %v441
      %v461 = vpop.f32.mrf.mxu0
      %v462 = vadd.f32 %v395, %v461
      %v463 = vpop.f32.mrf.mxu0
      %v464 = vadd.f32 %v397, %v463
      %465 = vmatmul.bf16.gmra.mxu0 %v444
      %v466 = vpop.f32.mrf.mxu0
      %v467 = vadd.f32 %v400, %v466
      %v468 = vpop.f32.mrf.mxu0
      %v469 = vadd.f32 %v402, %v468
      %470 = vmatmul.bf16.gmra.mxu0 %v447
      %v471 = vpop.f32.mrf.mxu0
      %v472 = vadd.f32 %v405, %v471
      %v473 = vpop.f32.mrf.mxu0
      %v474 = vadd.f32 %v407, %v473
      %475 = vmatmul.bf16.gmra.mxu0 %v450
      %v476 = vpop.f32.mrf.mxu0
      %v477 = vadd.f32 %v410, %v476
      %v478 = vpop.f32.mrf.mxu0
      %v479 = vadd.f32 %v412, %v478
      %480 = vdwg.mxu0
      %s481 = scalar_lea.vmem %s1, 16
      %v482 = vld [vmem:[%s481] sm:$0xf]
      %v483 = vld [vmem:[%s481 + $0x4] sm:$0xf]
      %v485 = vunpack.c.l.b16 %v232
      %v486 = vpack.c.b16 %v424, %v423
      %v487 = vpack.c.b16 %v426, %v425
      %v488 = vpack.c.b16 %v428, %v427
      %v489 = vpack.c.b16 %v485, %v429
      %v492 = vunpack.c.l.b16 %v482
      %v493 = vunpack.c.l.b16 %v483
      %v494 = vpack.c.b16 %v493, %v492
      %v497 = vsel %vm372, %v486, 0
      %v500 = vsel %vm372, %v487, 0
      %v503 = vsel %vm372, %v488, 0
      %v506 = vsel %vm372, %v489, 0
      %508 = vmatpush.bf16.msra.mxu0 0
      %509 = vmatpush.bf16.msra.mxu0 0
      %510 = vmatpush.bf16.msra.mxu0 0
      %511 = vmatpush.bf16.msra.mxu0 0
      %512 = vmatpush.bf16.msra.mxu0 0
      %513 = vmatpush.bf16.msra.mxu0 0
      %514 = vmatpush.bf16.msra.mxu0 0
      %515 = vmatpush.bf16.msra.mxu0 %v494
      %516 = vmatmul.bf16.gmra.mxu0 %v497
      %v517 = vpop.f32.mrf.mxu0
      %v518 = vadd.f32 0.0, %v517
      %v519 = vpop.f32.mrf.mxu0
      %v520 = vadd.f32 0.0, %v519
      %521 = vmatmul.bf16.gmra.mxu0 %v500
      %v522 = vpop.f32.mrf.mxu0
      %v523 = vadd.f32 0.0, %v522
      %v524 = vpop.f32.mrf.mxu0
      %v525 = vadd.f32 0.0, %v524
      %526 = vmatmul.bf16.gmra.mxu0 %v503
      %v527 = vpop.f32.mrf.mxu0
      %v528 = vadd.f32 0.0, %v527
      %v529 = vpop.f32.mrf.mxu0
      %v530 = vadd.f32 0.0, %v529
      %531 = vmatmul.bf16.gmra.mxu0 %v506
      %v532 = vpop.f32.mrf.mxu0
      %v533 = vadd.f32 0.0, %v532
      %v534 = vpop.f32.mrf.mxu0
      %v535 = vadd.f32 0.0, %v534
      %536 = vdwg.mxu0
      %v537 = vadd.f32 %v462, %v518
      %v538 = vadd.f32 %v464, %v520
      %v539 = vadd.f32 %v467, %v523
      %v540 = vadd.f32 %v469, %v525
      %v541 = vadd.f32 %v472, %v528
      %v542 = vadd.f32 %v474, %v530
      %v543 = vadd.f32 %v477, %v533
      %v544 = vadd.f32 %v479, %v535
      %v546 = vshrl.u32 %v232, 16
      %v548 = vrot.slane %v546, 4
      %v549 = vshll.u32 %v232, 16
      %v551 = vrot.slane %v549, 5
      %v552 = vor.u32 %v548, %v551
      %v553 = vrot.slane %v552, 4
      %v555 = vshll.u32 %v233, 16
      %v557 = vrot.slane %v555, 5
      %v558 = vsel %vm238, %v553, %v557
      %s559 = scalar_lea.vmem %s1, 24
      %v560 = vld [vmem:[%s559] sm:$0xf]
      %v561 = vld [vmem:[%s559 + $0x4] sm:$0xf]
      %v562 = vunpack.c.l.b16 %v558
      %v563 = vpack.c.b16 %v356, %v355
      %v564 = vpack.c.b16 %v358, %v357
      %v565 = vpack.c.b16 %v360, %v359
      %v566 = vpack.c.b16 %v562, %v361
      %v569 = vunpack.c.l.b16 %v560
      %v570 = vunpack.c.l.b16 %v561
      %v571 = vpack.c.b16 %v570, %v569
      %v574 = vsel %vm372, %v563, 0
      %v577 = vsel %vm372, %v564, 0
      %v580 = vsel %vm372, %v565, 0
      %v583 = vsel %vm372, %v566, 0
      %585 = vmatpush.bf16.msra.mxu0 0
      %586 = vmatpush.bf16.msra.mxu0 0
      %587 = vmatpush.bf16.msra.mxu0 0
      %588 = vmatpush.bf16.msra.mxu0 0
      %589 = vmatpush.bf16.msra.mxu0 0
      %590 = vmatpush.bf16.msra.mxu0 0
      %591 = vmatpush.bf16.msra.mxu0 0
      %592 = vmatpush.bf16.msra.mxu0 %v571
      %593 = vmatmul.bf16.gmra.mxu0 %v574
      %v594 = vpop.f32.mrf.mxu0
      %v595 = vadd.f32 0.0, %v594
      %v596 = vpop.f32.mrf.mxu0
      %v597 = vadd.f32 0.0, %v596
      %598 = vmatmul.bf16.gmra.mxu0 %v577
      %v599 = vpop.f32.mrf.mxu0
      %v600 = vadd.f32 0.0, %v599
      %v601 = vpop.f32.mrf.mxu0
      %v602 = vadd.f32 0.0, %v601
      %603 = vmatmul.bf16.gmra.mxu0 %v580
      %v604 = vpop.f32.mrf.mxu0
      %v605 = vadd.f32 0.0, %v604
      %v606 = vpop.f32.mrf.mxu0
      %v607 = vadd.f32 0.0, %v606
      %608 = vmatmul.bf16.gmra.mxu0 %v583
      %v609 = vpop.f32.mrf.mxu0
      %v610 = vadd.f32 0.0, %v609
      %v611 = vpop.f32.mrf.mxu0
      %v612 = vadd.f32 0.0, %v611
      %613 = vdwg.mxu0
      %v614 = vadd.f32 %v537, %v595
      %v615 = vadd.f32 %v538, %v597
      %v616 = vadd.f32 %v539, %v600
      %v617 = vadd.f32 %v540, %v602
      %v618 = vadd.f32 %v541, %v605
      %v619 = vadd.f32 %v542, %v607
      %v620 = vadd.f32 %v543, %v610
      %v621 = vadd.f32 %v544, %v612
      %v622 = vpack.c.bf16 %v614, %v614
      %v623 = vpack.c.bf16 %v615, %v615
      %v624 = vpack.c.bf16 %v616, %v616
      %v625 = vpack.c.bf16 %v617, %v617
      %v626 = vpack.c.bf16 %v618, %v618
      %v627 = vpack.c.bf16 %v619, %v619
      %v628 = vpack.c.bf16 %v620, %v620
      %v629 = vpack.c.bf16 %v621, %v621
      %vm630 = vcmask 60416
      %631 = vst.msk [vmem:[%s208] sm:$0xf] %vm630, %v622
      %632 = vst.msk [vmem:[%s208 + $0x4] sm:$0xf] %vm630, %v623
      %633 = vst.msk [vmem:[%s208 + $0x8] sm:$0xf] %vm630, %v624
      %634 = vst.msk [vmem:[%s208 + $0xc] sm:$0xf] %vm630, %v625
      %635 = vst.msk [vmem:[%s208 + $0x10] sm:$0xf] %vm630, %v626
      %636 = vst.msk [vmem:[%s208 + $0x14] sm:$0xf] %vm630, %v627
      %637 = vst.msk [vmem:[%s208 + $0x18] sm:$0xf] %vm630, %v628
      %638 = vst.msk [vmem:[%s208 + $0x1c] sm:$0xf] %vm630, %v629
      %vm639 = vcmask 64512
      %v640 = vsel %vm639, %v614, 0.0
      %v641 = vsel %vm639, %v615, 0.0
      %v642 = vadd.f32 %v640, %v641
      %v643 = vsel %vm639, %v616, 0.0
      %v644 = vadd.f32 %v642, %v643
      %v645 = vsel %vm639, %v617, 0.0
      %v646 = vadd.f32 %v644, %v645
      %v647 = vsel %vm639, %v618, 0.0
      %v648 = vadd.f32 %v646, %v647
      %v649 = vsel %vm639, %v619, 0.0
      %v650 = vadd.f32 %v648, %v649
      %v651 = vsel %vm639, %v620, 0.0
      %v652 = vadd.f32 %v650, %v651
      %v653 = vsel %vm639, %v621, 0.0
      %v654 = vadd.f32 %v652, %v653
      %v655 = vrot.slane %v654, 4
      %v656 = vadd.f32 %v654, %v655
      %v657 = vrot.slane %v656, 2
      %v658 = vadd.f32 %v656, %v657
      %v659 = vrot.slane %v658, 1
      %v660 = vadd.f32 %v658, %v659
      %v661 = vmul.f32 %v660, 0.015625
      %v662 = vsub.f32 %v614, %v661
      %v663 = vsub.f32 %v615, %v661
      %v664 = vsub.f32 %v616, %v661
      %v665 = vsub.f32 %v617, %v661
      %v666 = vsub.f32 %v618, %v661
      %v667 = vsub.f32 %v619, %v661
      %v668 = vsub.f32 %v620, %v661
      %v669 = vsub.f32 %v621, %v661
      %v670 = vmul.f32 %v662, %v662
      %v671 = vmul.f32 %v663, %v663
      %v672 = vmul.f32 %v664, %v664
      %v673 = vmul.f32 %v665, %v665
      %v674 = vmul.f32 %v666, %v666
      %v675 = vmul.f32 %v667, %v667
      %v676 = vmul.f32 %v668, %v668
      %v677 = vmul.f32 %v669, %v669
      %v678 = vsel %vm639, %v670, 0.0
      %v679 = vsel %vm639, %v671, 0.0
      %v680 = vadd.f32 %v678, %v679
      %v681 = vsel %vm639, %v672, 0.0
      %v682 = vadd.f32 %v680, %v681
      %v683 = vsel %vm639, %v673, 0.0
      %v684 = vadd.f32 %v682, %v683
      %v685 = vsel %vm639, %v674, 0.0
      %v686 = vadd.f32 %v684, %v685
      %v687 = vsel %vm639, %v675, 0.0
      %v688 = vadd.f32 %v686, %v687
      %v689 = vsel %vm639, %v676, 0.0
      %v690 = vadd.f32 %v688, %v689
      %v691 = vsel %vm639, %v677, 0.0
      %v692 = vadd.f32 %v690, %v691
      %v693 = vrot.slane %v692, 4
      %v694 = vadd.f32 %v692, %v693
      %v695 = vrot.slane %v694, 2
      %v696 = vadd.f32 %v694, %v695
      %v697 = vrot.slane %v696, 1
      %v698 = vadd.f32 %v696, %v697
      %vm699 = vcmask 57344
      %700 = vst.msk [vmem:[%s211] sm:$0x1] %vm699, %v660
      %701 = vst.msk [vmem:[%s214] sm:$0x1] %vm699, %v698
      %p702 = scmp.lt.s32.totalorder %s16, 1
      %s703 = scalar_select %p702, %s16, 1
      %s704 = smul.addr %s703, 8
      %s705 = smul.addr %s704, 4
      %s706 = scalar_lea.vmem %s2, %s705
      %p707 = scmp.lt.s32.totalorder %s16, 1
      %s708 = scalar_select %p707, %s16, 1
      %s709 = scalar_lea.vmem %s3, %s708
      %p710 = scmp.lt.s32.totalorder %s16, 1
      %s711 = scalar_select %p710, %s16, 1
      %s712 = scalar_lea.vmem %s4, %s711
      // Predicated region
      $region29: #{res_block_encoder_forward.4} parent=27 // pred_check
        %p713 = pneg %p81
      $region30: #{res_block_encoder_forward.4} parent=27 // pred_check_branch
        %715 = sbr.rel (%p713) target = $region32
      $region31: #{res_block_encoder_forward.4} parent=27 // pred_region
        _
      $region32: #{res_block_encoder_forward.4} parent=27 // pred_fallthru
        _
      // Predicated region
      $region33: #{res_block_encoder_forward.4} parent=27 // pred_check
        %p716 = pneg %p107
      $region34: #{res_block_encoder_forward.4} parent=27 // pred_check_branch
        %718 = sbr.rel (%p716) target = $region36
      $region35: #{res_block_encoder_forward.4} parent=27 // pred_region
        _
      $region36: #{res_block_encoder_forward.4} parent=27 // pred_fallthru
        _
      // Predicated region
      $region37: #{res_block_encoder_forward.4} parent=27 // pred_check
        %p719 = pneg %p133
      $region38: #{res_block_encoder_forward.4} parent=27 // pred_check_branch
        %721 = sbr.rel (%p719) target = $region40
      $region39: #{res_block_encoder_forward.4} parent=27 // pred_region
        _
      $region40: #{res_block_encoder_forward.4} parent=27 // pred_fallthru
        _
    $region28: #{res_block_encoder_forward.4} parent=5 // pred_fallthru
      _
    %p722 = scmp.le.s32.totalorder 2, %s11
    // Predicated region
    $region41: #{res_block_encoder_forward.4} parent=5 // pred_check
      %p723 = pneg %p722
    $region42: #{res_block_encoder_forward.4} parent=5 // pred_check_branch
      %725 = sbr.rel (%p723) target = $region44
    $region43: #{res_block_encoder_forward.4} parent=5 // pred_region
      %s726 = ssub.s32 %s11, 2
      // Predicated region
      $region45: #{res_block_encoder_forward.4} parent=43 // pred_check
        %p727 = pneg %p87
      $region46: #{res_block_encoder_forward.4} parent=43 // pred_check_branch
        %729 = sbr.rel (%p727) target = $region48
      $region47: #{res_block_encoder_forward.4} parent=43 // pred_region
        %p730 = scmp.lt.s32.totalorder %s17, 1
        %s731 = scalar_select %p730, %s17, 1
        %s732 = smul.addr %s731, 8
        %s733 = smul.addr %s732, 4
        %s734 = scalar_lea.vmem %s2, %s733
      $region48: #{res_block_encoder_forward.4} parent=43 // pred_fallthru
        _
      // Predicated region
      $region49: #{res_block_encoder_forward.4} parent=43 // pred_check
        %p735 = pneg %p113
      $region50: #{res_block_encoder_forward.4} parent=43 // pred_check_branch
        %737 = sbr.rel (%p735) target = $region52
      $region51: #{res_block_encoder_forward.4} parent=43 // pred_region
        %p738 = scmp.lt.s32.totalorder %s17, 1
        %s739 = scalar_select %p738, %s17, 1
        %s740 = scalar_lea.vmem %s3, %s739
      $region52: #{res_block_encoder_forward.4} parent=43 // pred_fallthru
        _
      // Predicated region
      $region53: #{res_block_encoder_forward.4} parent=43 // pred_check
        %p741 = pneg %p139
      $region54: #{res_block_encoder_forward.4} parent=43 // pred_check_branch
        %743 = sbr.rel (%p741) target = $region56
      $region55: #{res_block_encoder_forward.4} parent=43 // pred_region
        %p744 = scmp.lt.s32.totalorder %s17, 1
        %s745 = scalar_select %p744, %s17, 1
        %s746 = scalar_lea.vmem %s4, %s745
      $region56: #{res_block_encoder_forward.4} parent=43 // pred_fallthru
        _
    $region44: #{res_block_encoder_forward.4} parent=5 // pred_fallthru
      _
  $region6: #{res_block_encoder_forward.4} parent=0 // loop_footer
    %s15 = sadd.s32 1, %s11
  $region7: #{res_block_encoder_forward.4} parent=0 // loop_footer_branch
    %10 = sbr.rel target = $region3
  $region8: #{res_block_encoder_forward.4} parent=0 // loop_exit
    _

// kernel: res_block_encoder_forward.5
$region0: #{res_block_encoder_forward.5}
  #allocation0 [shape = 'u32[]', space=smem, size = 0x4, offset = 0x4, fixed_abs, tag = 'smem constant byte address 0x4 - core index']
  #allocation1 [shape = 'u32[72,128]{1,0:T(1,128)}', space=vmem, size = 0x9000, scoped, tag = 'internal scratch']
  %s0 = inlined_call_operand.vmem [shape: bf16[2,8,8,8], index: 0, kind: input, shape index: {}]
  %s1 = inlined_call_operand.vmem [shape: bf16[2,8,8,16], index: 1, kind: input, shape index: {}]
  %s2 = inlined_call_operand.vmem [shape: f32[1,8], index: 2, kind: input, shape index: {}]
  %s3 = inlined_call_operand.vmem [shape: f32[1,8], index: 3, kind: input, shape index: {}]
  %s4 = inlined_call_operand.vmem [shape: bf16[16,8], index: 4, kind: input, shape index: {}]
  %s5 = inlined_call_operand.vmem [shape: f32[1,8], index: 5, kind: input, shape index: {}]
  %s6 = inlined_call_operand.vmem [shape: f32[2,8,8,8], index: 6, kind: output, shape index: {}]
  %s7 = sld [smem:[#allocation0]]
  $region57: #{res_block_encoder_forward.5} parent=0
    _
  %s9 = ssub.s32 1, %s7
  %s10 = scalar_select 0, %s9, %s7
  loop: start=0, step=1, limit=4
  $region2: #{res_block_encoder_forward.5} parent=0 // loop_pre_header
    _
  $region3: #{res_block_encoder_forward.5} parent=0 // loop_header
    %s12 = sphi 0, %s16
    %p13 = scmp.ge.s32.totalorder %s12, 4
    %s22 = sphi 0, %s24
    %s25 = sphi 0, %s22
    %s26 = sphi 0, %s25
    %s42 = sphi 0, %s26
    %s48 = sphi 0, %s50
    %s51 = sphi 0, %s48
    %s52 = sphi 0, %s51
    %s68 = sphi 0, %s52
    %s72 = sphi 0, %s72
    %s74 = sphi 0, %s72
    %s75 = sphi 0, %s74
    %s89 = sphi 0, %s75
    %s93 = sphi 0, %s93
    %s95 = sphi 0, %s93
    %s96 = sphi 0, %s95
    %s110 = sphi 0, %s96
    %s114 = sphi 0, %s114
    %s116 = sphi 0, %s114
    %s117 = sphi 0, %s116
    %s131 = sphi 0, %s117
    %s135 = sphi 0, %s135
    %s137 = sphi 0, %s135
    %s138 = sphi 0, %s137
    %s152 = sphi 0, %s138
    %s158 = sphi 0, %s160
    %s161 = sphi 0, %s158
    %s162 = sphi 0, %s161
    %s178 = sphi 0, %s162
  $region4: #{res_block_encoder_forward.5} parent=0 // loop_header_branch
    %15 = sbr.rel (%p13) target = $region8
  $region5: #{res_block_encoder_forward.5} parent=0 // loop_body
    %s17 = ssub.s32 %s12, 1
    %s18 = ssub.s32 %s12, 2
    %s19 = sadd.s32 %s12, 1
    %s20 = ssub.s32 %s12, %s19
    %p21 = scmp.eq.s32.totalorder %s20, 0
    %s23 = sadd.s32 %s22, 1
    %s24 = scalar_select %p21, %s22, %s23
    %p27 = pneg %p21
    %p28 = scmp.eq.s32.totalorder %s12, 1
    %p29 = por %p27, %p28
    %p30 = scmp.ne.s32.totalorder %s22, %s25
    %p31 = scmp.eq.s32.totalorder %s12, 0
    %p32 = por %p30, %p31
    %p33 = scmp.ne.s32.totalorder %s22, %s25
    %p34 = scmp.eq.s32.totalorder %s17, 1
    %p35 = por %p33, %p34
    %p36 = scmp.ne.s32.totalorder %s25, %s26
    %p37 = scmp.eq.s32.totalorder %s17, 0
    %p38 = por %p36, %p37
    %p39 = scmp.ne.s32.totalorder %s25, %s26
    %p40 = scmp.eq.s32.totalorder %s18, 1
    %p41 = por %p39, %p40
    %p43 = scmp.ne.s32.totalorder %s26, %s42
    %p44 = scmp.eq.s32.totalorder %s18, 0
    %p45 = por %p43, %p44
    %s46 = ssub.s32 %s12, %s19
    %p47 = scmp.eq.s32.totalorder %s46, 0
    %s49 = sadd.s32 %s48, 1
    %s50 = scalar_select %p47, %s48, %s49
    %p53 = pneg %p47
    %p54 = scmp.eq.s32.totalorder %s12, 1
    %p55 = por %p53, %p54
    %p56 = scmp.ne.s32.totalorder %s48, %s51
    %p57 = scmp.eq.s32.totalorder %s12, 0
    %p58 = por %p56, %p57
    %p59 = scmp.ne.s32.totalorder %s48, %s51
    %p60 = scmp.eq.s32.totalorder %s17, 1
    %p61 = por %p59, %p60
    %p62 = scmp.ne.s32.totalorder %s51, %s52
    %p63 = scmp.eq.s32.totalorder %s17, 0
    %p64 = por %p62, %p63
    %p65 = scmp.ne.s32.totalorder %s51, %s52
    %p66 = scmp.eq.s32.totalorder %s18, 1
    %p67 = por %p65, %p66
    %p69 = scmp.ne.s32.totalorder %s52, %s68
    %p70 = scmp.eq.s32.totalorder %s18, 0
    %p71 = por %p69, %p70
    %s73 = sadd.s32 %s72, 1
    %p76 = scmp.eq.s32.totalorder %s12, 1
    %p77 = scmp.ne.s32.totalorder %s72, %s74
    %p78 = scmp.eq.s32.totalorder %s12, 0
    %p79 = por %p77, %p78
    %p80 = scmp.ne.s32.totalorder %s72, %s74
    %p81 = scmp.eq.s32.totalorder %s17, 1
    %p82 = por %p80, %p81
    %p83 = scmp.ne.s32.totalorder %s74, %s75
    %p84 = scmp.eq.s32.totalorder %s17, 0
    %p85 = por %p83, %p84
    %p86 = scmp.ne.s32.totalorder %s74, %s75
    %p87 = scmp.eq.s32.totalorder %s18, 1
    %p88 = por %p86, %p87
    %p90 = scmp.ne.s32.totalorder %s75, %s89
    %p91 = scmp.eq.s32.totalorder %s18, 0
    %p92 = por %p90, %p91
    %s94 = sadd.s32 %s93, 1
    %p97 = scmp.eq.s32.totalorder %s12, 1
    %p98 = scmp.ne.s32.totalorder %s93, %s95
    %p99 = scmp.eq.s32.totalorder %s12, 0
    %p100 = por %p98, %p99
    %p101 = scmp.ne.s32.totalorder %s93, %s95
    %p102 = scmp.eq.s32.totalorder %s17, 1
    %p103 = por %p101, %p102
    %p104 = scmp.ne.s32.totalorder %s95, %s96
    %p105 = scmp.eq.s32.totalorder %s17, 0
    %p106 = por %p104, %p105
    %p107 = scmp.ne.s32.totalorder %s95, %s96
    %p108 = scmp.eq.s32.totalorder %s18, 1
    %p109 = por %p107, %p108
    %p111 = scmp.ne.s32.totalorder %s96, %s110
    %p112 = scmp.eq.s32.totalorder %s18, 0
    %p113 = por %p111, %p112
    %s115 = sadd.s32 %s114, 1
    %p118 = scmp.eq.s32.totalorder %s12, 1
    %p119 = scmp.ne.s32.totalorder %s114, %s116
    %p120 = scmp.eq.s32.totalorder %s12, 0
    %p121 = por %p119, %p120
    %p122 = scmp.ne.s32.totalorder %s114, %s116
    %p123 = scmp.eq.s32.totalorder %s17, 1
    %p124 = por %p122, %p123
    %p125 = scmp.ne.s32.totalorder %s116, %s117
    %p126 = scmp.eq.s32.totalorder %s17, 0
    %p127 = por %p125, %p126
    %p128 = scmp.ne.s32.totalorder %s116, %s117
    %p129 = scmp.eq.s32.totalorder %s18, 1
    %p130 = por %p128, %p129
    %p132 = scmp.ne.s32.totalorder %s117, %s131
    %p133 = scmp.eq.s32.totalorder %s18, 0
    %p134 = por %p132, %p133
    %s136 = sadd.s32 %s135, 1
    %p139 = scmp.eq.s32.totalorder %s12, 1
    %p140 = scmp.ne.s32.totalorder %s135, %s137
    %p141 = scmp.eq.s32.totalorder %s12, 0
    %p142 = por %p140, %p141
    %p143 = scmp.ne.s32.totalorder %s135, %s137
    %p144 = scmp.eq.s32.totalorder %s17, 1
    %p145 = por %p143, %p144
    %p146 = scmp.ne.s32.totalorder %s137, %s138
    %p147 = scmp.eq.s32.totalorder %s17, 0
    %p148 = por %p146, %p147
    %p149 = scmp.ne.s32.totalorder %s137, %s138
    %p150 = scmp.eq.s32.totalorder %s18, 1
    %p151 = por %p149, %p150
    %p153 = scmp.ne.s32.totalorder %s138, %s152
    %p154 = scmp.eq.s32.totalorder %s18, 0
    %p155 = por %p153, %p154
    %s156 = ssub.s32 %s12, %s19
    %p157 = scmp.eq.s32.totalorder %s156, 0
    %s159 = sadd.s32 %s158, 1
    %s160 = scalar_select %p157, %s158, %s159
    %p163 = pneg %p157
    %p164 = scmp.eq.s32.totalorder %s12, 1
    %p165 = por %p163, %p164
    %p166 = scmp.ne.s32.totalorder %s158, %s161
    %p167 = scmp.eq.s32.totalorder %s12, 0
    %p168 = por %p166, %p167
    %p169 = scmp.ne.s32.totalorder %s158, %s161
    %p170 = scmp.eq.s32.totalorder %s17, 1
    %p171 = por %p169, %p170
    %p172 = scmp.ne.s32.totalorder %s161, %s162
    %p173 = scmp.eq.s32.totalorder %s17, 0
    %p174 = por %p172, %p173
    %p175 = scmp.ne.s32.totalorder %s161, %s162
    %p176 = scmp.eq.s32.totalorder %s18, 1
    %p177 = por %p175, %p176
    %p179 = scmp.ne.s32.totalorder %s162, %s178
    %p180 = scmp.eq.s32.totalorder %s18, 0
    %p181 = por %p179, %p180
    %p182 = scmp.le.s32.totalorder 1, %s12
    %p183 = scmp.lt.s32.totalorder %s12, 3
    %p184 = pnand %p182, %p183
    %p185 = pneg %p184
    // Predicated region
    $region9: #{res_block_encoder_forward.5} parent=5 // pred_check
      _
    $region10: #{res_block_encoder_forward.5} parent=5 // pred_check_branch
      %187 = sbr.rel (%p184) target = $region12
    $region11: #{res_block_encoder_forward.5} parent=5 // pred_region
      %s188 = ssub.s32 %s12, 1
      // Predicated region
      $region13: #{res_block_encoder_forward.5} parent=11 // pred_check
        %p189 = pneg %p85
      $region14: #{res_block_encoder_forward.5} parent=11 // pred_check_branch
        %191 = sbr.rel (%p189) target = $region16
      $region15: #{res_block_encoder_forward.5} parent=11 // pred_region
        _
      $region16: #{res_block_encoder_forward.5} parent=11 // pred_fallthru
        _
      // Predicated region
      $region17: #{res_block_encoder_forward.5} parent=11 // pred_check
        %p192 = pneg %p106
      $region18: #{res_block_encoder_forward.5} parent=11 // pred_check_branch
        %194 = sbr.rel (%p192) target = $region20
      $region19: #{res_block_encoder_forward.5} parent=11 // pred_region
        _
      $region20: #{res_block_encoder_forward.5} parent=11 // pred_fallthru
        _
      // Predicated region
      $region21: #{res_block_encoder_forward.5} parent=11 // pred_check
        %p195 = pneg %p127
      $region22: #{res_block_encoder_forward.5} parent=11 // pred_check_branch
        %197 = sbr.rel (%p195) target = $region24
      $region23: #{res_block_encoder_forward.5} parent=11 // pred_region
        _
      $region24: #{res_block_encoder_forward.5} parent=11 // pred_fallthru
        _
      // Predicated region
      $region25: #{res_block_encoder_forward.5} parent=11 // pred_check
        %p198 = pneg %p148
      $region26: #{res_block_encoder_forward.5} parent=11 // pred_check_branch
        %200 = sbr.rel (%p198) target = $region28
      $region27: #{res_block_encoder_forward.5} parent=11 // pred_region
        _
      $region28: #{res_block_encoder_forward.5} parent=11 // pred_fallthru
        _
    $region12: #{res_block_encoder_forward.5} parent=5 // pred_fallthru
      _
    %p201 = scmp.lt.s32.totalorder %s12, 2
    // Predicated region
    $region29: #{res_block_encoder_forward.5} parent=5 // pred_check
      %p202 = pneg %p201
    $region30: #{res_block_encoder_forward.5} parent=5 // pred_check_branch
      %204 = sbr.rel (%p202) target = $region32
    $region31: #{res_block_encoder_forward.5} parent=5 // pred_region
      // Predicated region
      $region33: #{res_block_encoder_forward.5} parent=31 // pred_check
        %p205 = pneg %p32
      $region34: #{res_block_encoder_forward.5} parent=31 // pred_check_branch
        %207 = sbr.rel (%p205) target = $region36
      $region35: #{res_block_encoder_forward.5} parent=31 // pred_region
        %p208 = scmp.lt.s32.totalorder %s12, 1
        %s209 = scalar_select %p208, %s12, 1
        %s210 = smul.addr %s209, 8
        %s211 = smul.addr %s210, 4
        %s212 = scalar_lea.vmem %s0, %s211
      $region36: #{res_block_encoder_forward.5} parent=31 // pred_fallthru
        _
      // Predicated region
      $region37: #{res_block_encoder_forward.5} parent=31 // pred_check
        %p213 = pneg %p58
      $region38: #{res_block_encoder_forward.5} parent=31 // pred_check_branch
        %215 = sbr.rel (%p213) target = $region40
      $region39: #{res_block_encoder_forward.5} parent=31 // pred_region
        %p216 = scmp.lt.s32.totalorder %s12, 1
        %s217 = scalar_select %p216, %s12, 1
        %s218 = smul.addr %s217, 8
        %s219 = smul.addr %s218, 4
        %s220 = scalar_lea.vmem %s1, %s219
      $region40: #{res_block_encoder_forward.5} parent=31 // pred_fallthru
        _
    $region32: #{res_block_encoder_forward.5} parent=5 // pred_fallthru
      _
    %p221 = scmp.le.s32.totalorder 1, %s12
    %p222 = scmp.lt.s32.totalorder %s12, 3
    %p223 = pnand %p221, %p222
    %p224 = pneg %p223
    // Predicated region
    $region41: #{res_block_encoder_forward.5} parent=5 // pred_check
      _
    $region42: #{res_block_encoder_forward.5} parent=5 // pred_check_branch
      %226 = sbr.rel (%p223) target = $region44
    $region43: #{res_block_encoder_forward.5} parent=5 // pred_region
      %s227 = ssub.s32 %s12, 1
      %p228 = scmp.lt.s32.totalorder %s17, 1
      %s229 = scalar_select %p228, %s17, 1
      %s230 = smul.addr %s229, 8
      %s231 = smul.addr %s230, 4
      %s232 = scalar_lea.vmem %s0, %s231
      %p233 = pneg %p38
      %p234 = pneg %p35
      %p235 = scmp.lt.s32.totalorder %s17, 1
      %s236 = scalar_select %p235, %s17, 1
      %s237 = smul.addr %s236, 8
      %s238 = smul.addr %s237, 4
      %s239 = scalar_lea.vmem %s1, %s238
      %p240 = pneg %p64
      %p241 = pneg %p61
      %p242 = pneg %p85
      %p243 = pneg %p82
      %p244 = pneg %p106
      %p245 = pneg %p103
      %p246 = pneg %p127
      %p247 = pneg %p124
      %p248 = pneg %p148
      %p249 = pneg %p145
      %p250 = pneg %p174
      %p251 = pneg %p171
      %p252 = scmp.lt.s32.totalorder %s17, 1
      %s253 = scalar_select %p252, %s17, 1
      %s254 = smul.addr %s253, 8
      %s255 = smul.addr %s254, 8
      %s256 = scalar_lea.vmem %s6, %s255
      %p257 = scmp.lt.s32.totalorder %s17, 1
      %s258 = scalar_select %p257, %s17, 1
      %s259 = smul.addr %s258, 8
      %s260 = smul.addr %s259, 4
      %s261 = scalar_lea.vmem %s0, %s260
      %p262 = scmp.lt.s32.totalorder %s17, 1
      %s263 = scalar_select %p262, %s17, 1
      %s264 = smul.addr %s263, 8
      %s265 = smul.addr %s264, 4
      %s266 = scalar_lea.vmem %s1, %s265
      %p267 = scmp.lt.s32.totalorder %s17, 1
      %s268 = scalar_select %p267, %s17, 1
      %s269 = smul.addr %s268, 8
      %s270 = smul.addr %s269, 8
      %s271 = scalar_lea.vmem %s6, %s270
      %v273 = vld [vmem:[%s266] sm:$0xf]
      %v274 = vld [vmem:[%s266 + $0x4] sm:$0xf]
      %v275 = vld [vmem:[%s266 + $0x8] sm:$0xf]
      %v276 = vld [vmem:[%s266 + $0xc] sm:$0xf]
      %v277 = vld [vmem:[%s266 + $0x10] sm:$0xf]
      %v278 = vld [vmem:[%s266 + $0x14] sm:$0xf]
      %v279 = vld [vmem:[%s266 + $0x18] sm:$0xf]
      %v280 = vld [vmem:[%s266 + $0x1c] sm:$0xf]
      %v281 = vld [vmem:[%s4] sm:$0xf]
      %v282 = vld [vmem:[%s4 + $0x4] sm:$0xf]
      %v283 = vld [vmem:[%s5] sm:$0x1]
      %v285 = vperm.slane %v283, 0
      %v295 = vunpack.c.l.b16 %v273
      %v296 = vunpack.c.l.b16 %v274
      %v297 = vunpack.c.l.b16 %v275
      %v298 = vunpack.c.l.b16 %v276
      %v299 = vunpack.c.l.b16 %v277
      %v300 = vunpack.c.l.b16 %v278
      %v301 = vunpack.c.l.b16 %v279
      %v302 = vunpack.c.l.b16 %v280
      %v303 = vpack.c.b16 %v296, %v295
      %v304 = vpack.c.b16 %v298, %v297
      %v305 = vpack.c.b16 %v300, %v299
      %v306 = vpack.c.b16 %v302, %v301
      %v309 = vunpack.c.l.b16 %v281
      %v310 = vunpack.c.l.b16 %v282
      %v311 = vpack.c.b16 %v310, %v309
      %vm313 = vcmask 130048
      %v315 = vsel %vm313, %v303, 0
      %v318 = vsel %vm313, %v304, 0
      %v321 = vsel %vm313, %v305, 0
      %v324 = vsel %vm313, %v306, 0
      %326 = vmatpush.bf16.msra.mxu0 0
      %327 = vmatpush.bf16.msra.mxu0 0
      %328 = vmatpush.bf16.msra.mxu0 0
      %329 = vmatpush.bf16.msra.mxu0 0
      %330 = vmatpush.bf16.msra.mxu0 0
      %331 = vmatpush.bf16.msra.mxu0 0
      %332 = vmatpush.bf16.msra.mxu0 0
      %333 = vmatpush.bf16.msra.mxu0 %v311
      %334 = vmatmul.bf16.gmra.mxu0 %v315
      %v335 = vpop.f32.mrf.mxu0
      %v336 = vadd.f32 %v285, %v335
      %v337 = vpop.f32.mrf.mxu0
      %v338 = vadd.f32 %v285, %v337
      %339 = vmatmul.bf16.gmra.mxu0 %v318
      %v340 = vpop.f32.mrf.mxu0
      %v341 = vadd.f32 %v285, %v340
      %v342 = vpop.f32.mrf.mxu0
      %v343 = vadd.f32 %v285, %v342
      %344 = vmatmul.bf16.gmra.mxu0 %v321
      %v345 = vpop.f32.mrf.mxu0
      %v346 = vadd.f32 %v285, %v345
      %v347 = vpop.f32.mrf.mxu0
      %v348 = vadd.f32 %v285, %v347
      %349 = vmatmul.bf16.gmra.mxu0 %v324
      %v350 = vpop.f32.mrf.mxu0
      %v351 = vadd.f32 %v285, %v350
      %v352 = vpop.f32.mrf.mxu0
      %v353 = vadd.f32 %v285, %v352
      %354 = vdwg.mxu0
      %v355 = vld [vmem:[%s261] sm:$0xf]
      %v356 = vld [vmem:[%s261 + $0x4] sm:$0xf]
      %v357 = vld [vmem:[%s261 + $0x8] sm:$0xf]
      %v358 = vld [vmem:[%s261 + $0xc] sm:$0xf]
      %v359 = vld [vmem:[%s261 + $0x10] sm:$0xf]
      %v360 = vld [vmem:[%s261 + $0x14] sm:$0xf]
      %v361 = vld [vmem:[%s261 + $0x18] sm:$0xf]
      %v362 = vld [vmem:[%s261 + $0x1c] sm:$0xf]
      %v363 = vunpack.c.l.bf16 %v355
      %v364 = vunpack.c.l.bf16 %v356
      %v365 = vunpack.c.l.bf16 %v357
      %v366 = vunpack.c.l.bf16 %v358
      %v367 = vunpack.c.l.bf16 %v359
      %v368 = vunpack.c.l.bf16 %v360
      %v369 = vunpack.c.l.bf16 %v361
      %v370 = vunpack.c.l.bf16 %v362
      %v371 = vld [vmem:[%s2] sm:$0x1]
      %v373 = vperm.slane %v371, 0
      %v375 = vmul.f32 %v363, %v373
      %v376 = vmul.f32 %v364, %v373
      %v377 = vmul.f32 %v365, %v373
      %v378 = vmul.f32 %v366, %v373
      %v379 = vmul.f32 %v367, %v373
      %v380 = vmul.f32 %v368, %v373
      %v381 = vmul.f32 %v369, %v373
      %v382 = vmul.f32 %v370, %v373
      %v383 = vld [vmem:[%s3] sm:$0x1]
      %v385 = vperm.slane %v383, 0
      %v387 = vadd.f32 %v375, %v385
      %v388 = vadd.f32 %v376, %v385
      %v389 = vadd.f32 %v377, %v385
      %v390 = vadd.f32 %v378, %v385
      %v391 = vadd.f32 %v379, %v385
      %v392 = vadd.f32 %v380, %v385
      %v393 = vadd.f32 %v381, %v385
      %v394 = vadd.f32 %v382, %v385
      %v395 = vadd.f32 %v387, %v336
      %v396 = vadd.f32 %v388, %v338
      %v397 = vadd.f32 %v389, %v341
      %v398 = vadd.f32 %v390, %v343
      %v399 = vadd.f32 %v391, %v346
      %v400 = vadd.f32 %v392, %v348
      %v401 = vadd.f32 %v393, %v351
      %v402 = vadd.f32 %v394, %v353
      %vm403 = vcmask 64512
      %404 = vst.msk [vmem:[%s271] sm:$0xff] %vm403, %v395
      %405 = vst.msk [vmem:[%s271 + $0x8] sm:$0xff] %vm403, %v396
      %406 = vst.msk [vmem:[%s271 + $0x10] sm:$0xff] %vm403, %v397
      %407 = vst.msk [vmem:[%s271 + $0x18] sm:$0xff] %vm403, %v398
      %408 = vst.msk [vmem:[%s271 + $0x20] sm:$0xff] %vm403, %v399
      %409 = vst.msk [vmem:[%s271 + $0x28] sm:$0xff] %vm403, %v400
      %410 = vst.msk [vmem:[%s271 + $0x30] sm:$0xff] %vm403, %v401
      %411 = vst.msk [vmem:[%s271 + $0x38] sm:$0xff] %vm403, %v402
      %p412 = scmp.lt.s32.totalorder %s17, 1
      %s413 = scalar_select %p412, %s17, 1
      %s414 = smul.addr %s413, 8
      %s415 = smul.addr %s414, 8
      %s416 = scalar_lea.vmem %s6, %s415
      // Predicated region
      $region45: #{res_block_encoder_forward.5} parent=43 // pred_check
        %p417 = pneg %p171
      $region46: #{res_block_encoder_forward.5} parent=43 // pred_check_branch
        %419 = sbr.rel (%p417) target = $region48
      $region47: #{res_block_encoder_forward.5} parent=43 // pred_region
        _
      $region48: #{res_block_encoder_forward.5} parent=43 // pred_fallthru
        _
    $region44: #{res_block_encoder_forward.5} parent=5 // pred_fallthru
      _
    %p420 = scmp.le.s32.totalorder 2, %s12
    // Predicated region
    $region49: #{res_block_encoder_forward.5} parent=5 // pred_check
      %p421 = pneg %p420
    $region50: #{res_block_encoder_forward.5} parent=5 // pred_check_branch
      %423 = sbr.rel (%p421) target = $region52
    $region51: #{res_block_encoder_forward.5} parent=5 // pred_region
      %s424 = ssub.s32 %s12, 2
      // Predicated region
      $region53: #{res_block_encoder_forward.5} parent=51 // pred_check
        %p425 = pneg %p177
      $region54: #{res_block_encoder_forward.5} parent=51 // pred_check_branch
        %427 = sbr.rel (%p425) target = $region56
      $region55: #{res_block_encoder_forward.5} parent=51 // pred_region
        %p428 = scmp.lt.s32.totalorder %s18, 1
        %s429 = scalar_select %p428, %s18, 1
        %s430 = smul.addr %s429, 8
        %s431 = smul.addr %s430, 8
        %s432 = scalar_lea.vmem %s6, %s431
      $region56: #{res_block_encoder_forward.5} parent=51 // pred_fallthru
        _
    $region52: #{res_block_encoder_forward.5} parent=5 // pred_fallthru
      _
  $region6: #{res_block_encoder_forward.5} parent=0 // loop_footer
    %s16 = sadd.s32 1, %s12
  $region7: #{res_block_encoder_forward.5} parent=0 // loop_footer_branch
    %11 = sbr.rel target = $region3
  $region8: #{res_block_encoder_forward.5} parent=0 // loop_exit
    _

</llo_original>
